<compile_context>
chip_gen: v5e
topology: v5e:2x2
jax: 0.10.0
libtpu: 0.0.40
codegen_flags: <defaults>
</compile_context>

<pallas_src>
import jax
import jax.numpy as jnp
from jax.experimental import pallas as pl
from jax.experimental.pallas import tpu as pltpu


def _round_up(x, m):
    return (x + m - 1) // m * m


def graph_reconstructor(pairs, hidden_states, weight, bias,
                        *, tile_m=None, out_dtype=jnp.float32):
    """pairs: [B, P, 2, 2] int, hidden_states: [B, S, H],
    weight: [3H, R] (transposed from torch's [R, 3H]), bias: [R]."""
    B, P = pairs.shape[0], pairs.shape[1]
    S, H = hidden_states.shape[1], hidden_states.shape[2]
    R = weight.shape[1]
    assert weight.shape[0] == 3 * H

    # ---- Tiling of the merged M = B*P dimension ------------------------------
    M_raw = B * P
    hid_itemsize = jnp.dtype(hidden_states.dtype).itemsize
    Hl = _round_up(H, 128)                       # lane-padded width (VMEM estimate)
    if tile_m is None:
        # Cap the double-buffered gather scratch at ~16 MiB; cap TM at 256 so
        # the MXU M dim is full on v5e (128) and v6e/v7x (256).
        budget = 16 * 2**20
        tm_budget = max(8, (budget // (2 * 4 * Hl * hid_itemsize)) // 8 * 8)
        tile_m = max(8, min(256, _round_up(M_raw, 8), tm_budget))
    TM = _round_up(tile_m, 8)                    # sublane-aligned tile height
    num_tiles = -(-M_raw // TM)
    NC = 2 if num_tiles >= 2 else 1              # parallel chunks (v7x: 2 TCs)
    T_inner = -(-num_tiles // NC)                # tiles per chunk ("arbitrary")
    M_pad = NC * T_inner * TM
    n_rows = 4 * TM                              # gathered rows per tile
    Rp = _round_up(R, 128)                       # lane-dense output width

    # ---- Index prep: flat row ids, component-major ---------------------------
    # pairs.reshape(B, P, 4) columns: (h_start, h_end, t_start, t_end).
    # rows[k, m] = flat index into hidden_flat for component k of output row m.
    p4 = pairs.reshape(B, P, 4).astype(jnp.int32)
    p4 = jnp.clip(p4, 0, S - 1)                  # guard dirty/OOB indices (DMA OOB faults)
    p4 = p4 + (jnp.arange(B, dtype=jnp.int32) * S)[:, None, None]
    rows = p4.reshape(M_raw, 4).T                # [4, M_raw]
    rows = jnp.pad(rows, ((0, 0), (0, M_pad - M_raw)))   # pad rows gather row 0

    hidden_flat = hidden_states.reshape(B * S, H)

    # ---- Weight prep: stack, fold exact 1/2, 1/2, 1/4 scales, lane-pad R -----
    scales = jnp.array([0.5, 0.5, 0.25], dtype=weight.dtype).reshape(3, 1, 1)
    w_stack = jnp.pad(weight.reshape(3, H, R) * scales,
                      ((0, 0), (0, 0), (0, Rp - R)))
    b2 = jnp.pad(bias.reshape(1, R).astype(jnp.float32), ((0, 0), (0, Rp - R)))

    # ---- VMEM budget derived from actual buffers (review item) ---------------
    gbuf_bytes = 2 * n_rows * Hl * hid_itemsize
    w_bytes = 2 * 3 * _round_up(H, 8) * Rp * jnp.dtype(weight.dtype).itemsize
    b_bytes = 2 * 8 * Rp * 4
    out_bytes = 2 * TM * Rp * jnp.dtype(out_dtype).itemsize
    vmem_limit = int(max(16 * 2**20,
                         min(100 * 2**20,
                             (gbuf_bytes + w_bytes + b_bytes + out_bytes) * 3 // 2
                             + (2 << 20))))

    def kernel(rows_ref, hid_ref, w_ref, b_ref, out_ref, gbuf, sem):
        c = pl.program_id(0)                     # parallel chunk
        t = pl.program_id(1)                     # tile within chunk (arbitrary)
        tt = c * T_inner + t                     # global tile index

        def issue_tile(tile_idx, slot):
            # 4*TM single-row gathers HBM -> VMEM slot, all on one semaphore.
            # Unrolled by 8 so descriptor pushes share loop/index overhead.
            base = tile_idx * TM
            dst0 = slot * n_rows

            @pl.loop(0, TM // 8)
            def _(jj):
                i0 = jj * 8
                for u in range(8):               # manual unroll-by-8
                    i = i0 + u
                    for k in range(4):           # hs | he | ts | te blocks
                        r = rows_ref[k, base + i]
                        pltpu.make_async_copy(
                            hid_ref.at[pl.ds(r, 1), :],
                            gbuf.at[pl.ds(dst0 + k * TM + i, 1), :],
                            sem.at[slot]).start()

        def wait_tile(slot):
            # Every copy in a tile is an identical (1, H) slice of the same
            # dtype, so each same-shaped wait decrements the slot semaphore by
            # exactly one copy's worth (shapes provably identical).
            @pl.loop(0, n_rows // 8)
            def _(jj):
                for _u in range(8):
                    pltpu.make_async_copy(
                        hid_ref.at[pl.ds(0, 1), :],
                        gbuf.at[pl.ds(0, 1), :],
                        sem.at[slot]).wait()

        # Prologue: first tile of this (core-local) chunk goes into slot 0.
        @pl.when(t == 0)
        def _():
            issue_tile(tt, 0)

        # Prefetch the next tile of the chunk into the other slot BEFORE the
        # wait, so its gather overlaps this tile's matmuls (P4 double-buffer).
        if T_inner > 1:
            @pl.when(t + 1 < T_inner)
            def _():
                issue_tile(tt + 1, (t + 1) % 2)

        slot = t % 2
        wait_tile(slot)

        # Head/tail span sums.  gbuf slot layout: [hs | he | ts | te], each TM
        # rows tall and sublane-aligned.  The /2, /2, /4 mean scales are folded
        # into the weight blocks, so plain sums suffice here.
        b0 = pl.multiple_of(slot * n_rows, 8)
        hs = gbuf[pl.ds(b0, TM), :]
        he = gbuf[pl.ds(pl.multiple_of(b0 + TM, 8), TM), :]
        ts = gbuf[pl.ds(pl.multiple_of(b0 + 2 * TM, 8), TM), :]
        te = gbuf[pl.ds(pl.multiple_of(b0 + 3 * TM, 8), TM), :]
        head2 = hs + he
        tail2 = ts + te

        # Fused Linear(3H -> R): split-weight formulation (no concat); f32
        # accumulation on the MXU; Rp is lane-dense so stores are full vst.
        acc = jnp.dot(head2, w_ref[0], preferred_element_type=jnp.float32)
        acc = acc + jnp.dot(tail2, w_ref[1], preferred_element_type=jnp.float32)
        acc = acc + jnp.dot(head2 * tail2, w_ref[2],
                            preferred_element_type=jnp.float32)
        acc = acc + b_ref[...].astype(jnp.float32)
        out_ref[...] = acc.astype(out_ref.dtype)

    out = pl.pallas_call(
        kernel,
        out_shape=jax.ShapeDtypeStruct((M_pad, Rp), out_dtype),
        grid_spec=pltpu.PrefetchScalarGridSpec(
            num_scalar_prefetch=1,                        # rows table -> SMEM
            grid=(NC, T_inner),
            in_specs=[
                pl.BlockSpec(memory_space=pl.ANY),        # hidden stays in HBM
                pl.BlockSpec((3, H, Rp), lambda c, t, rows: (0, 0, 0)),
                pl.BlockSpec((1, Rp), lambda c, t, rows: (0, 0)),
            ],
            out_specs=pl.BlockSpec((TM, Rp),
                                   lambda c, t, rows: (c * T_inner + t, 0)),
            scratch_shapes=[
                pltpu.VMEM((2 * n_rows, H), hidden_states.dtype),  # 2 gather slots
                pltpu.SemaphoreType.DMA((2,)),                     # 1 sem per slot
            ],
        ),
        compiler_params=pltpu.CompilerParams(
            dimension_semantics=("parallel", "arbitrary"),
            vmem_limit_bytes=vmem_limit,
        ),
    )(rows, hidden_flat, w_stack, b2)

    # Un-pad (coupled to the padding above: padded rows/lanes are garbage).
    return out[:M_raw, :R].reshape(B, P, R)


def reference_forward(pairs, hidden_states, weight, bias):
    # Pure-JAX reference matching the torch semantics.
    H = hidden_states.shape[-1]

    def gather(idx):
        return jnp.take_along_axis(
            hidden_states,
            idx[..., None].astype(jnp.int32).repeat(H, axis=-1), axis=1)

    head = (gather(pairs[:, :, 0, 0]) + gather(pairs[:, :, 0, 1])) / 2.0
    tail = (gather(pairs[:, :, 1, 0]) + gather(pairs[:, :, 1, 1])) / 2.0
    feat = jnp.concatenate([head, tail, head * tail], axis=-1)
    return jnp.dot(feat, weight, precision=jax.lax.Precision.HIGHEST) + bias


def _run_case(B, P, S, H, R, key, tile_m=None):
    k1, k2, k3, k4 = jax.random.split(key, 4)
    hidden_states = jax.random.normal(k1, (B, S, H), dtype=jnp.float32)
    pairs = jax.random.randint(k2, (B, P, 2, 2), 0, S, dtype=jnp.int32)
    # Linear(3H, R) init (torch default: U(-1/sqrt(fan_in), 1/sqrt(fan_in))).
    bound = 1.0 / (3 * H) ** 0.5
    weight = jax.random.uniform(k3, (3 * H, R), jnp.float32, -bound, bound)
    bias = jax.random.uniform(k4, (R,), jnp.float32, -bound, bound)

    out = graph_reconstructor(pairs, hidden_states, weight, bias, tile_m=tile_m)
    out = jax.block_until_ready(out)

    ref = reference_forward(pairs, hidden_states, weight, bias)
    assert out.shape == (B, P, R)
    assert jnp.allclose(out, ref, atol=2e-5, rtol=2e-5), (
        f"mismatch vs reference: max abs err {jnp.max(jnp.abs(out - ref))}")


if __name__ == "__main__":
    key = jax.random.PRNGKey(0)
    k0, k1 = jax.random.split(key)

    # Case 1: module's nominal small shapes; single-tile, single-chunk path.
    _run_case(B=2, P=8, S=16, H=32, R=8, key=k0)

    # Case 2: small forced tile -> multiple M tiles and 2 parallel chunks,
    # exercising the cross-step double-buffered gather (prefetch) path and
    # the merged-M tail padding.
    _run_case(B=3, P=10, S=32, H=32, R=8, key=k1, tile_m=8)

    print("KERNEL_OK")
</pallas_src>

<mosaic_0001>
module attributes {stable_mosaic.version = 11 : i64} {
  func.func @kernel(%arg0: i32, %arg1: i32, %arg2: memref<4x16xi32, #tpu.memory_space<smem>>, %arg3: memref<32x32xf32, #tpu.memory_space<any>>, %arg4: memref<3x32x128xf32, #tpu.memory_space<vmem>>, %arg5: memref<1x128xf32, #tpu.memory_space<vmem>>, %arg6: memref<16x128xf32, #tpu.memory_space<vmem>>, %arg7: memref<128x32xf32, #tpu.memory_space<vmem>>, %arg8: memref<2x!tpu.dma_semaphore, #tpu.memory_space<semaphore_mem>>) attributes {dimension_semantics = [#tpu.dimension_semantics<parallel>, #tpu.dimension_semantics<arbitrary>], iteration_bounds = array<i64: 1, 1>, scalar_prefetch = 1 : i64, scratch_operands = 2 : i64, tpu.core_type = #tpu.core_type<tc>, window_params = [{}, {pipeline_mode = #tpu.pipeline_mode<synchronous>, transform_indices = @transform_1, window_bounds = array<i64: 3, 32, 128>}, {pipeline_mode = #tpu.pipeline_mode<synchronous>, transform_indices = @transform_2, window_bounds = array<i64: 1, 128>}, {transform_indices = @transform_3, window_bounds = array<i64: 16, 128>}]} {
    %c1_i32 = arith.constant 1 : i32
    %0 = arith.muli %arg0, %c1_i32 : i32
    %1 = arith.addi %0, %arg1 : i32
    %c0_i32 = arith.constant 0 : i32
    %2 = arith.cmpi eq, %arg1, %c0_i32 : i32
    %3 = arith.extui %2 : i1 to i32
    %c0_i32_0 = arith.constant 0 : i32
    %4 = arith.cmpi ne, %3, %c0_i32_0 : i32
    scf.if %4 {
      %c16_i32_24 = arith.constant 16 : i32
      %50 = arith.muli %1, %c16_i32_24 : i32
      %c0_i32_25 = arith.constant 0 : i32
      %c2_i32_26 = arith.constant 2 : i32
      %51 = arith.addi %c0_i32_25, %c2_i32_26 : i32
      %c1_i32_27 = arith.constant 1 : i32
      scf.for %arg9 = %c0_i32_25 to %51 step %c1_i32_27  : i32 {
        %c1_i32_29 = arith.constant 1 : i32
        %52 = arith.muli %arg9, %c1_i32_29 : i32
        %c0_i32_30 = arith.constant 0 : i32
        %53 = arith.addi %c0_i32_30, %52 : i32
        %c8_i32_31 = arith.constant 8 : i32
        %54 = arith.muli %53, %c8_i32_31 : i32
        %c0_i32_32 = arith.constant 0 : i32
        %55 = arith.addi %54, %c0_i32_32 : i32
        %56 = arith.addi %50, %55 : i32
        %c0_33 = arith.constant 0 : index
        %57 = arith.index_cast %56 : i32 to index
        %58 = memref.load %arg2[%c0_33, %57] : memref<4x16xi32, #tpu.memory_space<smem>>
        %c0_i32_34 = arith.constant 0 : i32
        %59 = arith.addi %c0_i32_34, %55 : i32
        %c0_i32_35 = arith.constant 0 : i32
        %c0_i32_36 = arith.constant 0 : i32
        %60 = tpu.memref_slice %arg3[%58, %c0_i32_36] : memref<32x32xf32, #tpu.memory_space<any>> -> memref<1x32xf32, #tpu.memory_space<any>>
        %c0_i32_37 = arith.constant 0 : i32
        %61 = tpu.memref_slice %arg7[%59, %c0_i32_37] : memref<128x32xf32, #tpu.memory_space<vmem>> -> memref<1x32xf32, #tpu.memory_space<vmem>>
        %62 = tpu.memref_slice %arg8[%c0_i32_35] : memref<2x!tpu.dma_semaphore, #tpu.memory_space<semaphore_mem>> -> memref<1x!tpu.dma_semaphore, #tpu.memory_space<semaphore_mem>>
        %63 = tpu.memref_squeeze %62 : memref<1x!tpu.dma_semaphore, #tpu.memory_space<semaphore_mem>> -> memref<!tpu.dma_semaphore, #tpu.memory_space<semaphore_mem>>
        tpu.enqueue_dma source(%60 : memref<1x32xf32, #tpu.memory_space<any>>) target(%61 : memref<1x32xf32, #tpu.memory_space<vmem>>) target_semaphore(%63 : memref<!tpu.dma_semaphore, #tpu.memory_space<semaphore_mem>>)
        %64 = arith.addi %50, %55 : i32
        %c1_38 = arith.constant 1 : index
        %65 = arith.index_cast %64 : i32 to index
        %66 = memref.load %arg2[%c1_38, %65] : memref<4x16xi32, #tpu.memory_space<smem>>
        %c16_i32_39 = arith.constant 16 : i32
        %67 = arith.addi %c16_i32_39, %55 : i32
        %c0_i32_40 = arith.constant 0 : i32
        %c0_i32_41 = arith.constant 0 : i32
        %68 = tpu.memref_slice %arg3[%66, %c0_i32_41] : memref<32x32xf32, #tpu.memory_space<any>> -> memref<1x32xf32, #tpu.memory_space<any>>
        %c0_i32_42 = arith.constant 0 : i32
        %69 = tpu.memref_slice %arg7[%67, %c0_i32_42] : memref<128x32xf32, #tpu.memory_space<vmem>> -> memref<1x32xf32, #tpu.memory_space<vmem>>
        %70 = tpu.memref_slice %arg8[%c0_i32_40] : memref<2x!tpu.dma_semaphore, #tpu.memory_space<semaphore_mem>> -> memref<1x!tpu.dma_semaphore, #tpu.memory_space<semaphore_mem>>
        %71 = tpu.memref_squeeze %70 : memref<1x!tpu.dma_semaphore, #tpu.memory_space<semaphore_mem>> -> memref<!tpu.dma_semaphore, #tpu.memory_space<semaphore_mem>>
        tpu.enqueue_dma source(%68 : memref<1x32xf32, #tpu.memory_space<any>>) target(%69 : memref<1x32xf32, #tpu.memory_space<vmem>>) target_semaphore(%71 : memref<!tpu.dma_semaphore, #tpu.memory_space<semaphore_mem>>)
        %72 = arith.addi %50, %55 : i32
        %c2_43 = arith.constant 2 : index
        %73 = arith.index_cast %72 : i32 to index
        %74 = memref.load %arg2[%c2_43, %73] : memref<4x16xi32, #tpu.memory_space<smem>>
        %c32_i32_44 = arith.constant 32 : i32
        %75 = arith.addi %c32_i32_44, %55 : i32
        %c0_i32_45 = arith.constant 0 : i32
        %c0_i32_46 = arith.constant 0 : i32
        %76 = tpu.memref_slice %arg3[%74, %c0_i32_46] : memref<32x32xf32, #tpu.memory_space<any>> -> memref<1x32xf32, #tpu.memory_space<any>>
        %c0_i32_47 = arith.constant 0 : i32
        %77 = tpu.memref_slice %arg7[%75, %c0_i32_47] : memref<128x32xf32, #tpu.memory_space<vmem>> -> memref<1x32xf32, #tpu.memory_space<vmem>>
        %78 = tpu.memref_slice %arg8[%c0_i32_45] : memref<2x!tpu.dma_semaphore, #tpu.memory_space<semaphore_mem>> -> memref<1x!tpu.dma_semaphore, #tpu.memory_space<semaphore_mem>>
        %79 = tpu.memref_squeeze %78 : memref<1x!tpu.dma_semaphore, #tpu.memory_space<semaphore_mem>> -> memref<!tpu.dma_semaphore, #tpu.memory_space<semaphore_mem>>
        tpu.enqueue_dma source(%76 : memref<1x32xf32, #tpu.memory_space<any>>) target(%77 : memref<1x32xf32, #tpu.memory_space<vmem>>) target_semaphore(%79 : memref<!tpu.dma_semaphore, #tpu.memory_space<semaphore_mem>>)
        %80 = arith.addi %50, %55 : i32
        %c3 = arith.constant 3 : index
        %81 = arith.index_cast %80 : i32 to index
        %82 = memref.load %arg2[%c3, %81] : memref<4x16xi32, #tpu.memory_space<smem>>
        %c48_i32_48 = arith.constant 48 : i32
        %83 = arith.addi %c48_i32_48, %55 : i32
        %c0_i32_49 = arith.constant 0 : i32
        %c0_i32_50 = arith.constant 0 : i32
        %84 = tpu.memref_slice %arg3[%82, %c0_i32_50] : memref<32x32xf32, #tpu.memory_space<any>> -> memref<1x32xf32, #tpu.memory_space<any>>
        %c0_i32_51 = arith.constant 0 : i32
        %85 = tpu.memref_slice %arg7[%83, %c0_i32_51] : memref<128x32xf32, #tpu.memory_space<vmem>> -> memref<1x32xf32, #tpu.memory_space<vmem>>
        %86 = tpu.memref_slice %arg8[%c0_i32_49] : memref<2x!tpu.dma_semaphore, #tpu.memory_space<semaphore_mem>> -> memref<1x!tpu.dma_semaphore, #tpu.memory_space<semaphore_mem>>
        %87 = tpu.memref_squeeze %86 : memref<1x!tpu.dma_semaphore, #tpu.memory_space<semaphore_mem>> -> memref<!tpu.dma_semaphore, #tpu.memory_space<semaphore_mem>>
        tpu.enqueue_dma source(%84 : memref<1x32xf32, #tpu.memory_space<any>>) target(%85 : memref<1x32xf32, #tpu.memory_space<vmem>>) target_semaphore(%87 : memref<!tpu.dma_semaphore, #tpu.memory_space<semaphore_mem>>)
        %c1_i32_52 = arith.constant 1 : i32
        %88 = arith.addi %54, %c1_i32_52 : i32
        %89 = arith.addi %50, %88 : i32
        %c0_53 = arith.constant 0 : index
        %90 = arith.index_cast %89 : i32 to index
        %91 = memref.load %arg2[%c0_53, %90] : memref<4x16xi32, #tpu.memory_space<smem>>
        %c0_i32_54 = arith.constant 0 : i32
        %92 = arith.addi %c0_i32_54, %88 : i32
        %c0_i32_55 = arith.constant 0 : i32
        %c0_i32_56 = arith.constant 0 : i32
        %93 = tpu.memref_slice %arg3[%91, %c0_i32_56] : memref<32x32xf32, #tpu.memory_space<any>> -> memref<1x32xf32, #tpu.memory_space<any>>
        %c0_i32_57 = arith.constant 0 : i32
        %94 = tpu.memref_slice %arg7[%92, %c0_i32_57] : memref<128x32xf32, #tpu.memory_space<vmem>> -> memref<1x32xf32, #tpu.memory_space<vmem>>
        %95 = tpu.memref_slice %arg8[%c0_i32_55] : memref<2x!tpu.dma_semaphore, #tpu.memory_space<semaphore_mem>> -> memref<1x!tpu.dma_semaphore, #tpu.memory_space<semaphore_mem>>
        %96 = tpu.memref_squeeze %95 : memref<1x!tpu.dma_semaphore, #tpu.memory_space<semaphore_mem>> -> memref<!tpu.dma_semaphore, #tpu.memory_space<semaphore_mem>>
        tpu.enqueue_dma source(%93 : memref<1x32xf32, #tpu.memory_space<any>>) target(%94 : memref<1x32xf32, #tpu.memory_space<vmem>>) target_semaphore(%96 : memref<!tpu.dma_semaphore, #tpu.memory_space<semaphore_mem>>)
        %97 = arith.addi %50, %88 : i32
        %c1_58 = arith.constant 1 : index
        %98 = arith.index_cast %97 : i32 to index
        %99 = memref.load %arg2[%c1_58, %98] : memref<4x16xi32, #tpu.memory_space<smem>>
        %c16_i32_59 = arith.constant 16 : i32
        %100 = arith.addi %c16_i32_59, %88 : i32
        %c0_i32_60 = arith.constant 0 : i32
        %c0_i32_61 = arith.constant 0 : i32
        %101 = tpu.memref_slice %arg3[%99, %c0_i32_61] : memref<32x32xf32, #tpu.memory_space<any>> -> memref<1x32xf32, #tpu.memory_space<any>>
        %c0_i32_62 = arith.constant 0 : i32
        %102 = tpu.memref_slice %arg7[%100, %c0_i32_62] : memref<128x32xf32, #tpu.memory_space<vmem>> -> memref<1x32xf32, #tpu.memory_space<vmem>>
        %103 = tpu.memref_slice %arg8[%c0_i32_60] : memref<2x!tpu.dma_semaphore, #tpu.memory_space<semaphore_mem>> -> memref<1x!tpu.dma_semaphore, #tpu.memory_space<semaphore_mem>>
        %104 = tpu.memref_squeeze %103 : memref<1x!tpu.dma_semaphore, #tpu.memory_space<semaphore_mem>> -> memref<!tpu.dma_semaphore, #tpu.memory_space<semaphore_mem>>
        tpu.enqueue_dma source(%101 : memref<1x32xf32, #tpu.memory_space<any>>) target(%102 : memref<1x32xf32, #tpu.memory_space<vmem>>) target_semaphore(%104 : memref<!tpu.dma_semaphore, #tpu.memory_space<semaphore_mem>>)
        %105 = arith.addi %50, %88 : i32
        %c2_63 = arith.constant 2 : index
        %106 = arith.index_cast %105 : i32 to index
        %107 = memref.load %arg2[%c2_63, %106] : memref<4x16xi32, #tpu.memory_space<smem>>
        %c32_i32_64 = arith.constant 32 : i32
        %108 = arith.addi %c32_i32_64, %88 : i32
        %c0_i32_65 = arith.constant 0 : i32
        %c0_i32_66 = arith.constant 0 : i32
        %109 = tpu.memref_slice %arg3[%107, %c0_i32_66] : memref<32x32xf32, #tpu.memory_space<any>> -> memref<1x32xf32, #tpu.memory_space<any>>
        %c0_i32_67 = arith.constant 0 : i32
        %110 = tpu.memref_slice %arg7[%108, %c0_i32_67] : memref<128x32xf32, #tpu.memory_space<vmem>> -> memref<1x32xf32, #tpu.memory_space<vmem>>
        %111 = tpu.memref_slice %arg8[%c0_i32_65] : memref<2x!tpu.dma_semaphore, #tpu.memory_space<semaphore_mem>> -> memref<1x!tpu.dma_semaphore, #tpu.memory_space<semaphore_mem>>
        %112 = tpu.memref_squeeze %111 : memref<1x!tpu.dma_semaphore, #tpu.memory_space<semaphore_mem>> -> memref<!tpu.dma_semaphore, #tpu.memory_space<semaphore_mem>>
        tpu.enqueue_dma source(%109 : memref<1x32xf32, #tpu.memory_space<any>>) target(%110 : memref<1x32xf32, #tpu.memory_space<vmem>>) target_semaphore(%112 : memref<!tpu.dma_semaphore, #tpu.memory_space<semaphore_mem>>)
        %113 = arith.addi %50, %88 : i32
        %c3_68 = arith.constant 3 : index
        %114 = arith.index_cast %113 : i32 to index
        %115 = memref.load %arg2[%c3_68, %114] : memref<4x16xi32, #tpu.memory_space<smem>>
        %c48_i32_69 = arith.constant 48 : i32
        %116 = arith.addi %c48_i32_69, %88 : i32
        %c0_i32_70 = arith.constant 0 : i32
        %c0_i32_71 = arith.constant 0 : i32
        %117 = tpu.memref_slice %arg3[%115, %c0_i32_71] : memref<32x32xf32, #tpu.memory_space<any>> -> memref<1x32xf32, #tpu.memory_space<any>>
        %c0_i32_72 = arith.constant 0 : i32
        %118 = tpu.memref_slice %arg7[%116, %c0_i32_72] : memref<128x32xf32, #tpu.memory_space<vmem>> -> memref<1x32xf32, #tpu.memory_space<vmem>>
        %119 = tpu.memref_slice %arg8[%c0_i32_70] : memref<2x!tpu.dma_semaphore, #tpu.memory_space<semaphore_mem>> -> memref<1x!tpu.dma_semaphore, #tpu.memory_space<semaphore_mem>>
        %120 = tpu.memref_squeeze %119 : memref<1x!tpu.dma_semaphore, #tpu.memory_space<semaphore_mem>> -> memref<!tpu.dma_semaphore, #tpu.memory_space<semaphore_mem>>
        tpu.enqueue_dma source(%117 : memref<1x32xf32, #tpu.memory_space<any>>) target(%118 : memref<1x32xf32, #tpu.memory_space<vmem>>) target_semaphore(%120 : memref<!tpu.dma_semaphore, #tpu.memory_space<semaphore_mem>>)
        %c2_i32_73 = arith.constant 2 : i32
        %121 = arith.addi %54, %c2_i32_73 : i32
        %122 = arith.addi %50, %121 : i32
        %c0_74 = arith.constant 0 : index
        %123 = arith.index_cast %122 : i32 to index
        %124 = memref.load %arg2[%c0_74, %123] : memref<4x16xi32, #tpu.memory_space<smem>>
        %c0_i32_75 = arith.constant 0 : i32
        %125 = arith.addi %c0_i32_75, %121 : i32
        %c0_i32_76 = arith.constant 0 : i32
        %c0_i32_77 = arith.constant 0 : i32
        %126 = tpu.memref_slice %arg3[%124, %c0_i32_77] : memref<32x32xf32, #tpu.memory_space<any>> -> memref<1x32xf32, #tpu.memory_space<any>>
        %c0_i32_78 = arith.constant 0 : i32
        %127 = tpu.memref_slice %arg7[%125, %c0_i32_78] : memref<128x32xf32, #tpu.memory_space<vmem>> -> memref<1x32xf32, #tpu.memory_space<vmem>>
        %128 = tpu.memref_slice %arg8[%c0_i32_76] : memref<2x!tpu.dma_semaphore, #tpu.memory_space<semaphore_mem>> -> memref<1x!tpu.dma_semaphore, #tpu.memory_space<semaphore_mem>>
        %129 = tpu.memref_squeeze %128 : memref<1x!tpu.dma_semaphore, #tpu.memory_space<semaphore_mem>> -> memref<!tpu.dma_semaphore, #tpu.memory_space<semaphore_mem>>
        tpu.enqueue_dma source(%126 : memref<1x32xf32, #tpu.memory_space<any>>) target(%127 : memref<1x32xf32, #tpu.memory_space<vmem>>) target_semaphore(%129 : memref<!tpu.dma_semaphore, #tpu.memory_space<semaphore_mem>>)
        %130 = arith.addi %50, %121 : i32
        %c1_79 = arith.constant 1 : index
        %131 = arith.index_cast %130 : i32 to index
        %132 = memref.load %arg2[%c1_79, %131] : memref<4x16xi32, #tpu.memory_space<smem>>
        %c16_i32_80 = arith.constant 16 : i32
        %133 = arith.addi %c16_i32_80, %121 : i32
        %c0_i32_81 = arith.constant 0 : i32
        %c0_i32_82 = arith.constant 0 : i32
        %134 = tpu.memref_slice %arg3[%132, %c0_i32_82] : memref<32x32xf32, #tpu.memory_space<any>> -> memref<1x32xf32, #tpu.memory_space<any>>
        %c0_i32_83 = arith.constant 0 : i32
        %135 = tpu.memref_slice %arg7[%133, %c0_i32_83] : memref<128x32xf32, #tpu.memory_space<vmem>> -> memref<1x32xf32, #tpu.memory_space<vmem>>
        %136 = tpu.memref_slice %arg8[%c0_i32_81] : memref<2x!tpu.dma_semaphore, #tpu.memory_space<semaphore_mem>> -> memref<1x!tpu.dma_semaphore, #tpu.memory_space<semaphore_mem>>
        %137 = tpu.memref_squeeze %136 : memref<1x!tpu.dma_semaphore, #tpu.memory_space<semaphore_mem>> -> memref<!tpu.dma_semaphore, #tpu.memory_space<semaphore_mem>>
        tpu.enqueue_dma source(%134 : memref<1x32xf32, #tpu.memory_space<any>>) target(%135 : memref<1x32xf32, #tpu.memory_space<vmem>>) target_semaphore(%137 : memref<!tpu.dma_semaphore, #tpu.memory_space<semaphore_mem>>)
        %138 = arith.addi %50, %121 : i32
        %c2_84 = arith.constant 2 : index
        %139 = arith.index_cast %138 : i32 to index
        %140 = memref.load %arg2[%c2_84, %139] : memref<4x16xi32, #tpu.memory_space<smem>>
        %c32_i32_85 = arith.constant 32 : i32
        %141 = arith.addi %c32_i32_85, %121 : i32
        %c0_i32_86 = arith.constant 0 : i32
        %c0_i32_87 = arith.constant 0 : i32
        %142 = tpu.memref_slice %arg3[%140, %c0_i32_87] : memref<32x32xf32, #tpu.memory_space<any>> -> memref<1x32xf32, #tpu.memory_space<any>>
        %c0_i32_88 = arith.constant 0 : i32
        %143 = tpu.memref_slice %arg7[%141, %c0_i32_88] : memref<128x32xf32, #tpu.memory_space<vmem>> -> memref<1x32xf32, #tpu.memory_space<vmem>>
        %144 = tpu.memref_slice %arg8[%c0_i32_86] : memref<2x!tpu.dma_semaphore, #tpu.memory_space<semaphore_mem>> -> memref<1x!tpu.dma_semaphore, #tpu.memory_space<semaphore_mem>>
        %145 = tpu.memref_squeeze %144 : memref<1x!tpu.dma_semaphore, #tpu.memory_space<semaphore_mem>> -> memref<!tpu.dma_semaphore, #tpu.memory_space<semaphore_mem>>
        tpu.enqueue_dma source(%142 : memref<1x32xf32, #tpu.memory_space<any>>) target(%143 : memref<1x32xf32, #tpu.memory_space<vmem>>) target_semaphore(%145 : memref<!tpu.dma_semaphore, #tpu.memory_space<semaphore_mem>>)
        %146 = arith.addi %50, %121 : i32
        %c3_89 = arith.constant 3 : index
        %147 = arith.index_cast %146 : i32 to index
        %148 = memref.load %arg2[%c3_89, %147] : memref<4x16xi32, #tpu.memory_space<smem>>
        %c48_i32_90 = arith.constant 48 : i32
        %149 = arith.addi %c48_i32_90, %121 : i32
        %c0_i32_91 = arith.constant 0 : i32
        %c0_i32_92 = arith.constant 0 : i32
        %150 = tpu.memref_slice %arg3[%148, %c0_i32_92] : memref<32x32xf32, #tpu.memory_space<any>> -> memref<1x32xf32, #tpu.memory_space<any>>
        %c0_i32_93 = arith.constant 0 : i32
        %151 = tpu.memref_slice %arg7[%149, %c0_i32_93] : memref<128x32xf32, #tpu.memory_space<vmem>> -> memref<1x32xf32, #tpu.memory_space<vmem>>
        %152 = tpu.memref_slice %arg8[%c0_i32_91] : memref<2x!tpu.dma_semaphore, #tpu.memory_space<semaphore_mem>> -> memref<1x!tpu.dma_semaphore, #tpu.memory_space<semaphore_mem>>
        %153 = tpu.memref_squeeze %152 : memref<1x!tpu.dma_semaphore, #tpu.memory_space<semaphore_mem>> -> memref<!tpu.dma_semaphore, #tpu.memory_space<semaphore_mem>>
        tpu.enqueue_dma source(%150 : memref<1x32xf32, #tpu.memory_space<any>>) target(%151 : memref<1x32xf32, #tpu.memory_space<vmem>>) target_semaphore(%153 : memref<!tpu.dma_semaphore, #tpu.memory_space<semaphore_mem>>)
        %c3_i32 = arith.constant 3 : i32
        %154 = arith.addi %54, %c3_i32 : i32
        %155 = arith.addi %50, %154 : i32
        %c0_94 = arith.constant 0 : index
        %156 = arith.index_cast %155 : i32 to index
        %157 = memref.load %arg2[%c0_94, %156] : memref<4x16xi32, #tpu.memory_space<smem>>
        %c0_i32_95 = arith.constant 0 : i32
        %158 = arith.addi %c0_i32_95, %154 : i32
        %c0_i32_96 = arith.constant 0 : i32
        %c0_i32_97 = arith.constant 0 : i32
        %159 = tpu.memref_slice %arg3[%157, %c0_i32_97] : memref<32x32xf32, #tpu.memory_space<any>> -> memref<1x32xf32, #tpu.memory_space<any>>
        %c0_i32_98 = arith.constant 0 : i32
        %160 = tpu.memref_slice %arg7[%158, %c0_i32_98] : memref<128x32xf32, #tpu.memory_space<vmem>> -> memref<1x32xf32, #tpu.memory_space<vmem>>
        %161 = tpu.memref_slice %arg8[%c0_i32_96] : memref<2x!tpu.dma_semaphore, #tpu.memory_space<semaphore_mem>> -> memref<1x!tpu.dma_semaphore, #tpu.memory_space<semaphore_mem>>
        %162 = tpu.memref_squeeze %161 : memref<1x!tpu.dma_semaphore, #tpu.memory_space<semaphore_mem>> -> memref<!tpu.dma_semaphore, #tpu.memory_space<semaphore_mem>>
        tpu.enqueue_dma source(%159 : memref<1x32xf32, #tpu.memory_space<any>>) target(%160 : memref<1x32xf32, #tpu.memory_space<vmem>>) target_semaphore(%162 : memref<!tpu.dma_semaphore, #tpu.memory_space<semaphore_mem>>)
        %163 = arith.addi %50, %154 : i32
        %c1_99 = arith.constant 1 : index
        %164 = arith.index_cast %163 : i32 to index
        %165 = memref.load %arg2[%c1_99, %164] : memref<4x16xi32, #tpu.memory_space<smem>>
        %c16_i32_100 = arith.constant 16 : i32
        %166 = arith.addi %c16_i32_100, %154 : i32
        %c0_i32_101 = arith.constant 0 : i32
        %c0_i32_102 = arith.constant 0 : i32
        %167 = tpu.memref_slice %arg3[%165, %c0_i32_102] : memref<32x32xf32, #tpu.memory_space<any>> -> memref<1x32xf32, #tpu.memory_space<any>>
        %c0_i32_103 = arith.constant 0 : i32
        %168 = tpu.memref_slice %arg7[%166, %c0_i32_103] : memref<128x32xf32, #tpu.memory_space<vmem>> -> memref<1x32xf32, #tpu.memory_space<vmem>>
        %169 = tpu.memref_slice %arg8[%c0_i32_101] : memref<2x!tpu.dma_semaphore, #tpu.memory_space<semaphore_mem>> -> memref<1x!tpu.dma_semaphore, #tpu.memory_space<semaphore_mem>>
        %170 = tpu.memref_squeeze %169 : memref<1x!tpu.dma_semaphore, #tpu.memory_space<semaphore_mem>> -> memref<!tpu.dma_semaphore, #tpu.memory_space<semaphore_mem>>
        tpu.enqueue_dma source(%167 : memref<1x32xf32, #tpu.memory_space<any>>) target(%168 : memref<1x32xf32, #tpu.memory_space<vmem>>) target_semaphore(%170 : memref<!tpu.dma_semaphore, #tpu.memory_space<semaphore_mem>>)
        %171 = arith.addi %50, %154 : i32
        %c2_104 = arith.constant 2 : index
        %172 = arith.index_cast %171 : i32 to index
        %173 = memref.load %arg2[%c2_104, %172] : memref<4x16xi32, #tpu.memory_space<smem>>
        %c32_i32_105 = arith.constant 32 : i32
        %174 = arith.addi %c32_i32_105, %154 : i32
        %c0_i32_106 = arith.constant 0 : i32
        %c0_i32_107 = arith.constant 0 : i32
        %175 = tpu.memref_slice %arg3[%173, %c0_i32_107] : memref<32x32xf32, #tpu.memory_space<any>> -> memref<1x32xf32, #tpu.memory_space<any>>
        %c0_i32_108 = arith.constant 0 : i32
        %176 = tpu.memref_slice %arg7[%174, %c0_i32_108] : memref<128x32xf32, #tpu.memory_space<vmem>> -> memref<1x32xf32, #tpu.memory_space<vmem>>
        %177 = tpu.memref_slice %arg8[%c0_i32_106] : memref<2x!tpu.dma_semaphore, #tpu.memory_space<semaphore_mem>> -> memref<1x!tpu.dma_semaphore, #tpu.memory_space<semaphore_mem>>
        %178 = tpu.memref_squeeze %177 : memref<1x!tpu.dma_semaphore, #tpu.memory_space<semaphore_mem>> -> memref<!tpu.dma_semaphore, #tpu.memory_space<semaphore_mem>>
        tpu.enqueue_dma source(%175 : memref<1x32xf32, #tpu.memory_space<any>>) target(%176 : memref<1x32xf32, #tpu.memory_space<vmem>>) target_semaphore(%178 : memref<!tpu.dma_semaphore, #tpu.memory_space<semaphore_mem>>)
        %179 = arith.addi %50, %154 : i32
        %c3_109 = arith.constant 3 : index
        %180 = arith.index_cast %179 : i32 to index
        %181 = memref.load %arg2[%c3_109, %180] : memref<4x16xi32, #tpu.memory_space<smem>>
        %c48_i32_110 = arith.constant 48 : i32
        %182 = arith.addi %c48_i32_110, %154 : i32
        %c0_i32_111 = arith.constant 0 : i32
        %c0_i32_112 = arith.constant 0 : i32
        %183 = tpu.memref_slice %arg3[%181, %c0_i32_112] : memref<32x32xf32, #tpu.memory_space<any>> -> memref<1x32xf32, #tpu.memory_space<any>>
        %c0_i32_113 = arith.constant 0 : i32
        %184 = tpu.memref_slice %arg7[%182, %c0_i32_113] : memref<128x32xf32, #tpu.memory_space<vmem>> -> memref<1x32xf32, #tpu.memory_space<vmem>>
        %185 = tpu.memref_slice %arg8[%c0_i32_111] : memref<2x!tpu.dma_semaphore, #tpu.memory_space<semaphore_mem>> -> memref<1x!tpu.dma_semaphore, #tpu.memory_space<semaphore_mem>>
        %186 = tpu.memref_squeeze %185 : memref<1x!tpu.dma_semaphore, #tpu.memory_space<semaphore_mem>> -> memref<!tpu.dma_semaphore, #tpu.memory_space<semaphore_mem>>
        tpu.enqueue_dma source(%183 : memref<1x32xf32, #tpu.memory_space<any>>) target(%184 : memref<1x32xf32, #tpu.memory_space<vmem>>) target_semaphore(%186 : memref<!tpu.dma_semaphore, #tpu.memory_space<semaphore_mem>>)
        %c4_i32 = arith.constant 4 : i32
        %187 = arith.addi %54, %c4_i32 : i32
        %188 = arith.addi %50, %187 : i32
        %c0_114 = arith.constant 0 : index
        %189 = arith.index_cast %188 : i32 to index
        %190 = memref.load %arg2[%c0_114, %189] : memref<4x16xi32, #tpu.memory_space<smem>>
        %c0_i32_115 = arith.constant 0 : i32
        %191 = arith.addi %c0_i32_115, %187 : i32
        %c0_i32_116 = arith.constant 0 : i32
        %c0_i32_117 = arith.constant 0 : i32
        %192 = tpu.memref_slice %arg3[%190, %c0_i32_117] : memref<32x32xf32, #tpu.memory_space<any>> -> memref<1x32xf32, #tpu.memory_space<any>>
        %c0_i32_118 = arith.constant 0 : i32
        %193 = tpu.memref_slice %arg7[%191, %c0_i32_118] : memref<128x32xf32, #tpu.memory_space<vmem>> -> memref<1x32xf32, #tpu.memory_space<vmem>>
        %194 = tpu.memref_slice %arg8[%c0_i32_116] : memref<2x!tpu.dma_semaphore, #tpu.memory_space<semaphore_mem>> -> memref<1x!tpu.dma_semaphore, #tpu.memory_space<semaphore_mem>>
        %195 = tpu.memref_squeeze %194 : memref<1x!tpu.dma_semaphore, #tpu.memory_space<semaphore_mem>> -> memref<!tpu.dma_semaphore, #tpu.memory_space<semaphore_mem>>
        tpu.enqueue_dma source(%192 : memref<1x32xf32, #tpu.memory_space<any>>) target(%193 : memref<1x32xf32, #tpu.memory_space<vmem>>) target_semaphore(%195 : memref<!tpu.dma_semaphore, #tpu.memory_space<semaphore_mem>>)
        %196 = arith.addi %50, %187 : i32
        %c1_119 = arith.constant 1 : index
        %197 = arith.index_cast %196 : i32 to index
        %198 = memref.load %arg2[%c1_119, %197] : memref<4x16xi32, #tpu.memory_space<smem>>
        %c16_i32_120 = arith.constant 16 : i32
        %199 = arith.addi %c16_i32_120, %187 : i32
        %c0_i32_121 = arith.constant 0 : i32
        %c0_i32_122 = arith.constant 0 : i32
        %200 = tpu.memref_slice %arg3[%198, %c0_i32_122] : memref<32x32xf32, #tpu.memory_space<any>> -> memref<1x32xf32, #tpu.memory_space<any>>
        %c0_i32_123 = arith.constant 0 : i32
        %201 = tpu.memref_slice %arg7[%199, %c0_i32_123] : memref<128x32xf32, #tpu.memory_space<vmem>> -> memref<1x32xf32, #tpu.memory_space<vmem>>
        %202 = tpu.memref_slice %arg8[%c0_i32_121] : memref<2x!tpu.dma_semaphore, #tpu.memory_space<semaphore_mem>> -> memref<1x!tpu.dma_semaphore, #tpu.memory_space<semaphore_mem>>
        %203 = tpu.memref_squeeze %202 : memref<1x!tpu.dma_semaphore, #tpu.memory_space<semaphore_mem>> -> memref<!tpu.dma_semaphore, #tpu.memory_space<semaphore_mem>>
        tpu.enqueue_dma source(%200 : memref<1x32xf32, #tpu.memory_space<any>>) target(%201 : memref<1x32xf32, #tpu.memory_space<vmem>>) target_semaphore(%203 : memref<!tpu.dma_semaphore, #tpu.memory_space<semaphore_mem>>)
        %204 = arith.addi %50, %187 : i32
        %c2_124 = arith.constant 2 : index
        %205 = arith.index_cast %204 : i32 to index
        %206 = memref.load %arg2[%c2_124, %205] : memref<4x16xi32, #tpu.memory_space<smem>>
        %c32_i32_125 = arith.constant 32 : i32
        %207 = arith.addi %c32_i32_125, %187 : i32
        %c0_i32_126 = arith.constant 0 : i32
        %c0_i32_127 = arith.constant 0 : i32
        %208 = tpu.memref_slice %arg3[%206, %c0_i32_127] : memref<32x32xf32, #tpu.memory_space<any>> -> memref<1x32xf32, #tpu.memory_space<any>>
        %c0_i32_128 = arith.constant 0 : i32
        %209 = tpu.memref_slice %arg7[%207, %c0_i32_128] : memref<128x32xf32, #tpu.memory_space<vmem>> -> memref<1x32xf32, #tpu.memory_space<vmem>>
        %210 = tpu.memref_slice %arg8[%c0_i32_126] : memref<2x!tpu.dma_semaphore, #tpu.memory_space<semaphore_mem>> -> memref<1x!tpu.dma_semaphore, #tpu.memory_space<semaphore_mem>>
        %211 = tpu.memref_squeeze %210 : memref<1x!tpu.dma_semaphore, #tpu.memory_space<semaphore_mem>> -> memref<!tpu.dma_semaphore, #tpu.memory_space<semaphore_mem>>
        tpu.enqueue_dma source(%208 : memref<1x32xf32, #tpu.memory_space<any>>) target(%209 : memref<1x32xf32, #tpu.memory_space<vmem>>) target_semaphore(%211 : memref<!tpu.dma_semaphore, #tpu.memory_space<semaphore_mem>>)
        %212 = arith.addi %50, %187 : i32
        %c3_129 = arith.constant 3 : index
        %213 = arith.index_cast %212 : i32 to index
        %214 = memref.load %arg2[%c3_129, %213] : memref<4x16xi32, #tpu.memory_space<smem>>
        %c48_i32_130 = arith.constant 48 : i32
        %215 = arith.addi %c48_i32_130, %187 : i32
        %c0_i32_131 = arith.constant 0 : i32
        %c0_i32_132 = arith.constant 0 : i32
        %216 = tpu.memref_slice %arg3[%214, %c0_i32_132] : memref<32x32xf32, #tpu.memory_space<any>> -> memref<1x32xf32, #tpu.memory_space<any>>
        %c0_i32_133 = arith.constant 0 : i32
        %217 = tpu.memref_slice %arg7[%215, %c0_i32_133] : memref<128x32xf32, #tpu.memory_space<vmem>> -> memref<1x32xf32, #tpu.memory_space<vmem>>
        %218 = tpu.memref_slice %arg8[%c0_i32_131] : memref<2x!tpu.dma_semaphore, #tpu.memory_space<semaphore_mem>> -> memref<1x!tpu.dma_semaphore, #tpu.memory_space<semaphore_mem>>
        %219 = tpu.memref_squeeze %218 : memref<1x!tpu.dma_semaphore, #tpu.memory_space<semaphore_mem>> -> memref<!tpu.dma_semaphore, #tpu.memory_space<semaphore_mem>>
        tpu.enqueue_dma source(%216 : memref<1x32xf32, #tpu.memory_space<any>>) target(%217 : memref<1x32xf32, #tpu.memory_space<vmem>>) target_semaphore(%219 : memref<!tpu.dma_semaphore, #tpu.memory_space<semaphore_mem>>)
        %c5_i32 = arith.constant 5 : i32
        %220 = arith.addi %54, %c5_i32 : i32
        %221 = arith.addi %50, %220 : i32
        %c0_134 = arith.constant 0 : index
        %222 = arith.index_cast %221 : i32 to index
        %223 = memref.load %arg2[%c0_134, %222] : memref<4x16xi32, #tpu.memory_space<smem>>
        %c0_i32_135 = arith.constant 0 : i32
        %224 = arith.addi %c0_i32_135, %220 : i32
        %c0_i32_136 = arith.constant 0 : i32
        %c0_i32_137 = arith.constant 0 : i32
        %225 = tpu.memref_slice %arg3[%223, %c0_i32_137] : memref<32x32xf32, #tpu.memory_space<any>> -> memref<1x32xf32, #tpu.memory_space<any>>
        %c0_i32_138 = arith.constant 0 : i32
        %226 = tpu.memref_slice %arg7[%224, %c0_i32_138] : memref<128x32xf32, #tpu.memory_space<vmem>> -> memref<1x32xf32, #tpu.memory_space<vmem>>
        %227 = tpu.memref_slice %arg8[%c0_i32_136] : memref<2x!tpu.dma_semaphore, #tpu.memory_space<semaphore_mem>> -> memref<1x!tpu.dma_semaphore, #tpu.memory_space<semaphore_mem>>
        %228 = tpu.memref_squeeze %227 : memref<1x!tpu.dma_semaphore, #tpu.memory_space<semaphore_mem>> -> memref<!tpu.dma_semaphore, #tpu.memory_space<semaphore_mem>>
        tpu.enqueue_dma source(%225 : memref<1x32xf32, #tpu.memory_space<any>>) target(%226 : memref<1x32xf32, #tpu.memory_space<vmem>>) target_semaphore(%228 : memref<!tpu.dma_semaphore, #tpu.memory_space<semaphore_mem>>)
        %229 = arith.addi %50, %220 : i32
        %c1_139 = arith.constant 1 : index
        %230 = arith.index_cast %229 : i32 to index
        %231 = memref.load %arg2[%c1_139, %230] : memref<4x16xi32, #tpu.memory_space<smem>>
        %c16_i32_140 = arith.constant 16 : i32
        %232 = arith.addi %c16_i32_140, %220 : i32
        %c0_i32_141 = arith.constant 0 : i32
        %c0_i32_142 = arith.constant 0 : i32
        %233 = tpu.memref_slice %arg3[%231, %c0_i32_142] : memref<32x32xf32, #tpu.memory_space<any>> -> memref<1x32xf32, #tpu.memory_space<any>>
        %c0_i32_143 = arith.constant 0 : i32
        %234 = tpu.memref_slice %arg7[%232, %c0_i32_143] : memref<128x32xf32, #tpu.memory_space<vmem>> -> memref<1x32xf32, #tpu.memory_space<vmem>>
        %235 = tpu.memref_slice %arg8[%c0_i32_141] : memref<2x!tpu.dma_semaphore, #tpu.memory_space<semaphore_mem>> -> memref<1x!tpu.dma_semaphore, #tpu.memory_space<semaphore_mem>>
        %236 = tpu.memref_squeeze %235 : memref<1x!tpu.dma_semaphore, #tpu.memory_space<semaphore_mem>> -> memref<!tpu.dma_semaphore, #tpu.memory_space<semaphore_mem>>
        tpu.enqueue_dma source(%233 : memref<1x32xf32, #tpu.memory_space<any>>) target(%234 : memref<1x32xf32, #tpu.memory_space<vmem>>) target_semaphore(%236 : memref<!tpu.dma_semaphore, #tpu.memory_space<semaphore_mem>>)
        %237 = arith.addi %50, %220 : i32
        %c2_144 = arith.constant 2 : index
        %238 = arith.index_cast %237 : i32 to index
        %239 = memref.load %arg2[%c2_144, %238] : memref<4x16xi32, #tpu.memory_space<smem>>
        %c32_i32_145 = arith.constant 32 : i32
        %240 = arith.addi %c32_i32_145, %220 : i32
        %c0_i32_146 = arith.constant 0 : i32
        %c0_i32_147 = arith.constant 0 : i32
        %241 = tpu.memref_slice %arg3[%239, %c0_i32_147] : memref<32x32xf32, #tpu.memory_space<any>> -> memref<1x32xf32, #tpu.memory_space<any>>
        %c0_i32_148 = arith.constant 0 : i32
        %242 = tpu.memref_slice %arg7[%240, %c0_i32_148] : memref<128x32xf32, #tpu.memory_space<vmem>> -> memref<1x32xf32, #tpu.memory_space<vmem>>
        %243 = tpu.memref_slice %arg8[%c0_i32_146] : memref<2x!tpu.dma_semaphore, #tpu.memory_space<semaphore_mem>> -> memref<1x!tpu.dma_semaphore, #tpu.memory_space<semaphore_mem>>
        %244 = tpu.memref_squeeze %243 : memref<1x!tpu.dma_semaphore, #tpu.memory_space<semaphore_mem>> -> memref<!tpu.dma_semaphore, #tpu.memory_space<semaphore_mem>>
        tpu.enqueue_dma source(%241 : memref<1x32xf32, #tpu.memory_space<any>>) target(%242 : memref<1x32xf32, #tpu.memory_space<vmem>>) target_semaphore(%244 : memref<!tpu.dma_semaphore, #tpu.memory_space<semaphore_mem>>)
        %245 = arith.addi %50, %220 : i32
        %c3_149 = arith.constant 3 : index
        %246 = arith.index_cast %245 : i32 to index
        %247 = memref.load %arg2[%c3_149, %246] : memref<4x16xi32, #tpu.memory_space<smem>>
        %c48_i32_150 = arith.constant 48 : i32
        %248 = arith.addi %c48_i32_150, %220 : i32
        %c0_i32_151 = arith.constant 0 : i32
        %c0_i32_152 = arith.constant 0 : i32
        %249 = tpu.memref_slice %arg3[%247, %c0_i32_152] : memref<32x32xf32, #tpu.memory_space<any>> -> memref<1x32xf32, #tpu.memory_space<any>>
        %c0_i32_153 = arith.constant 0 : i32
        %250 = tpu.memref_slice %arg7[%248, %c0_i32_153] : memref<128x32xf32, #tpu.memory_space<vmem>> -> memref<1x32xf32, #tpu.memory_space<vmem>>
        %251 = tpu.memref_slice %arg8[%c0_i32_151] : memref<2x!tpu.dma_semaphore, #tpu.memory_space<semaphore_mem>> -> memref<1x!tpu.dma_semaphore, #tpu.memory_space<semaphore_mem>>
        %252 = tpu.memref_squeeze %251 : memref<1x!tpu.dma_semaphore, #tpu.memory_space<semaphore_mem>> -> memref<!tpu.dma_semaphore, #tpu.memory_space<semaphore_mem>>
        tpu.enqueue_dma source(%249 : memref<1x32xf32, #tpu.memory_space<any>>) target(%250 : memref<1x32xf32, #tpu.memory_space<vmem>>) target_semaphore(%252 : memref<!tpu.dma_semaphore, #tpu.memory_space<semaphore_mem>>)
        %c6_i32 = arith.constant 6 : i32
        %253 = arith.addi %54, %c6_i32 : i32
        %254 = arith.addi %50, %253 : i32
        %c0_154 = arith.constant 0 : index
        %255 = arith.index_cast %254 : i32 to index
        %256 = memref.load %arg2[%c0_154, %255] : memref<4x16xi32, #tpu.memory_space<smem>>
        %c0_i32_155 = arith.constant 0 : i32
        %257 = arith.addi %c0_i32_155, %253 : i32
        %c0_i32_156 = arith.constant 0 : i32
        %c0_i32_157 = arith.constant 0 : i32
        %258 = tpu.memref_slice %arg3[%256, %c0_i32_157] : memref<32x32xf32, #tpu.memory_space<any>> -> memref<1x32xf32, #tpu.memory_space<any>>
        %c0_i32_158 = arith.constant 0 : i32
        %259 = tpu.memref_slice %arg7[%257, %c0_i32_158] : memref<128x32xf32, #tpu.memory_space<vmem>> -> memref<1x32xf32, #tpu.memory_space<vmem>>
        %260 = tpu.memref_slice %arg8[%c0_i32_156] : memref<2x!tpu.dma_semaphore, #tpu.memory_space<semaphore_mem>> -> memref<1x!tpu.dma_semaphore, #tpu.memory_space<semaphore_mem>>
        %261 = tpu.memref_squeeze %260 : memref<1x!tpu.dma_semaphore, #tpu.memory_space<semaphore_mem>> -> memref<!tpu.dma_semaphore, #tpu.memory_space<semaphore_mem>>
        tpu.enqueue_dma source(%258 : memref<1x32xf32, #tpu.memory_space<any>>) target(%259 : memref<1x32xf32, #tpu.memory_space<vmem>>) target_semaphore(%261 : memref<!tpu.dma_semaphore, #tpu.memory_space<semaphore_mem>>)
        %262 = arith.addi %50, %253 : i32
        %c1_159 = arith.constant 1 : index
        %263 = arith.index_cast %262 : i32 to index
        %264 = memref.load %arg2[%c1_159, %263] : memref<4x16xi32, #tpu.memory_space<smem>>
        %c16_i32_160 = arith.constant 16 : i32
        %265 = arith.addi %c16_i32_160, %253 : i32
        %c0_i32_161 = arith.constant 0 : i32
        %c0_i32_162 = arith.constant 0 : i32
        %266 = tpu.memref_slice %arg3[%264, %c0_i32_162] : memref<32x32xf32, #tpu.memory_space<any>> -> memref<1x32xf32, #tpu.memory_space<any>>
        %c0_i32_163 = arith.constant 0 : i32
        %267 = tpu.memref_slice %arg7[%265, %c0_i32_163] : memref<128x32xf32, #tpu.memory_space<vmem>> -> memref<1x32xf32, #tpu.memory_space<vmem>>
        %268 = tpu.memref_slice %arg8[%c0_i32_161] : memref<2x!tpu.dma_semaphore, #tpu.memory_space<semaphore_mem>> -> memref<1x!tpu.dma_semaphore, #tpu.memory_space<semaphore_mem>>
        %269 = tpu.memref_squeeze %268 : memref<1x!tpu.dma_semaphore, #tpu.memory_space<semaphore_mem>> -> memref<!tpu.dma_semaphore, #tpu.memory_space<semaphore_mem>>
        tpu.enqueue_dma source(%266 : memref<1x32xf32, #tpu.memory_space<any>>) target(%267 : memref<1x32xf32, #tpu.memory_space<vmem>>) target_semaphore(%269 : memref<!tpu.dma_semaphore, #tpu.memory_space<semaphore_mem>>)
        %270 = arith.addi %50, %253 : i32
        %c2_164 = arith.constant 2 : index
        %271 = arith.index_cast %270 : i32 to index
        %272 = memref.load %arg2[%c2_164, %271] : memref<4x16xi32, #tpu.memory_space<smem>>
        %c32_i32_165 = arith.constant 32 : i32
        %273 = arith.addi %c32_i32_165, %253 : i32
        %c0_i32_166 = arith.constant 0 : i32
        %c0_i32_167 = arith.constant 0 : i32
        %274 = tpu.memref_slice %arg3[%272, %c0_i32_167] : memref<32x32xf32, #tpu.memory_space<any>> -> memref<1x32xf32, #tpu.memory_space<any>>
        %c0_i32_168 = arith.constant 0 : i32
        %275 = tpu.memref_slice %arg7[%273, %c0_i32_168] : memref<128x32xf32, #tpu.memory_space<vmem>> -> memref<1x32xf32, #tpu.memory_space<vmem>>
        %276 = tpu.memref_slice %arg8[%c0_i32_166] : memref<2x!tpu.dma_semaphore, #tpu.memory_space<semaphore_mem>> -> memref<1x!tpu.dma_semaphore, #tpu.memory_space<semaphore_mem>>
        %277 = tpu.memref_squeeze %276 : memref<1x!tpu.dma_semaphore, #tpu.memory_space<semaphore_mem>> -> memref<!tpu.dma_semaphore, #tpu.memory_space<semaphore_mem>>
        tpu.enqueue_dma source(%274 : memref<1x32xf32, #tpu.memory_space<any>>) target(%275 : memref<1x32xf32, #tpu.memory_space<vmem>>) target_semaphore(%277 : memref<!tpu.dma_semaphore, #tpu.memory_space<semaphore_mem>>)
        %278 = arith.addi %50, %253 : i32
        %c3_169 = arith.constant 3 : index
        %279 = arith.index_cast %278 : i32 to index
        %280 = memref.load %arg2[%c3_169, %279] : memref<4x16xi32, #tpu.memory_space<smem>>
        %c48_i32_170 = arith.constant 48 : i32
        %281 = arith.addi %c48_i32_170, %253 : i32
        %c0_i32_171 = arith.constant 0 : i32
        %c0_i32_172 = arith.constant 0 : i32
        %282 = tpu.memref_slice %arg3[%280, %c0_i32_172] : memref<32x32xf32, #tpu.memory_space<any>> -> memref<1x32xf32, #tpu.memory_space<any>>
        %c0_i32_173 = arith.constant 0 : i32
        %283 = tpu.memref_slice %arg7[%281, %c0_i32_173] : memref<128x32xf32, #tpu.memory_space<vmem>> -> memref<1x32xf32, #tpu.memory_space<vmem>>
        %284 = tpu.memref_slice %arg8[%c0_i32_171] : memref<2x!tpu.dma_semaphore, #tpu.memory_space<semaphore_mem>> -> memref<1x!tpu.dma_semaphore, #tpu.memory_space<semaphore_mem>>
        %285 = tpu.memref_squeeze %284 : memref<1x!tpu.dma_semaphore, #tpu.memory_space<semaphore_mem>> -> memref<!tpu.dma_semaphore, #tpu.memory_space<semaphore_mem>>
        tpu.enqueue_dma source(%282 : memref<1x32xf32, #tpu.memory_space<any>>) target(%283 : memref<1x32xf32, #tpu.memory_space<vmem>>) target_semaphore(%285 : memref<!tpu.dma_semaphore, #tpu.memory_space<semaphore_mem>>)
        %c7_i32 = arith.constant 7 : i32
        %286 = arith.addi %54, %c7_i32 : i32
        %287 = arith.addi %50, %286 : i32
        %c0_174 = arith.constant 0 : index
        %288 = arith.index_cast %287 : i32 to index
        %289 = memref.load %arg2[%c0_174, %288] : memref<4x16xi32, #tpu.memory_space<smem>>
        %c0_i32_175 = arith.constant 0 : i32
        %290 = arith.addi %c0_i32_175, %286 : i32
        %c0_i32_176 = arith.constant 0 : i32
        %c0_i32_177 = arith.constant 0 : i32
        %291 = tpu.memref_slice %arg3[%289, %c0_i32_177] : memref<32x32xf32, #tpu.memory_space<any>> -> memref<1x32xf32, #tpu.memory_space<any>>
        %c0_i32_178 = arith.constant 0 : i32
        %292 = tpu.memref_slice %arg7[%290, %c0_i32_178] : memref<128x32xf32, #tpu.memory_space<vmem>> -> memref<1x32xf32, #tpu.memory_space<vmem>>
        %293 = tpu.memref_slice %arg8[%c0_i32_176] : memref<2x!tpu.dma_semaphore, #tpu.memory_space<semaphore_mem>> -> memref<1x!tpu.dma_semaphore, #tpu.memory_space<semaphore_mem>>
        %294 = tpu.memref_squeeze %293 : memref<1x!tpu.dma_semaphore, #tpu.memory_space<semaphore_mem>> -> memref<!tpu.dma_semaphore, #tpu.memory_space<semaphore_mem>>
        tpu.enqueue_dma source(%291 : memref<1x32xf32, #tpu.memory_space<any>>) target(%292 : memref<1x32xf32, #tpu.memory_space<vmem>>) target_semaphore(%294 : memref<!tpu.dma_semaphore, #tpu.memory_space<semaphore_mem>>)
        %295 = arith.addi %50, %286 : i32
        %c1_179 = arith.constant 1 : index
        %296 = arith.index_cast %295 : i32 to index
        %297 = memref.load %arg2[%c1_179, %296] : memref<4x16xi32, #tpu.memory_space<smem>>
        %c16_i32_180 = arith.constant 16 : i32
        %298 = arith.addi %c16_i32_180, %286 : i32
        %c0_i32_181 = arith.constant 0 : i32
        %c0_i32_182 = arith.constant 0 : i32
        %299 = tpu.memref_slice %arg3[%297, %c0_i32_182] : memref<32x32xf32, #tpu.memory_space<any>> -> memref<1x32xf32, #tpu.memory_space<any>>
        %c0_i32_183 = arith.constant 0 : i32
        %300 = tpu.memref_slice %arg7[%298, %c0_i32_183] : memref<128x32xf32, #tpu.memory_space<vmem>> -> memref<1x32xf32, #tpu.memory_space<vmem>>
        %301 = tpu.memref_slice %arg8[%c0_i32_181] : memref<2x!tpu.dma_semaphore, #tpu.memory_space<semaphore_mem>> -> memref<1x!tpu.dma_semaphore, #tpu.memory_space<semaphore_mem>>
        %302 = tpu.memref_squeeze %301 : memref<1x!tpu.dma_semaphore, #tpu.memory_space<semaphore_mem>> -> memref<!tpu.dma_semaphore, #tpu.memory_space<semaphore_mem>>
        tpu.enqueue_dma source(%299 : memref<1x32xf32, #tpu.memory_space<any>>) target(%300 : memref<1x32xf32, #tpu.memory_space<vmem>>) target_semaphore(%302 : memref<!tpu.dma_semaphore, #tpu.memory_space<semaphore_mem>>)
        %303 = arith.addi %50, %286 : i32
        %c2_184 = arith.constant 2 : index
        %304 = arith.index_cast %303 : i32 to index
        %305 = memref.load %arg2[%c2_184, %304] : memref<4x16xi32, #tpu.memory_space<smem>>
        %c32_i32_185 = arith.constant 32 : i32
        %306 = arith.addi %c32_i32_185, %286 : i32
        %c0_i32_186 = arith.constant 0 : i32
        %c0_i32_187 = arith.constant 0 : i32
        %307 = tpu.memref_slice %arg3[%305, %c0_i32_187] : memref<32x32xf32, #tpu.memory_space<any>> -> memref<1x32xf32, #tpu.memory_space<any>>
        %c0_i32_188 = arith.constant 0 : i32
        %308 = tpu.memref_slice %arg7[%306, %c0_i32_188] : memref<128x32xf32, #tpu.memory_space<vmem>> -> memref<1x32xf32, #tpu.memory_space<vmem>>
        %309 = tpu.memref_slice %arg8[%c0_i32_186] : memref<2x!tpu.dma_semaphore, #tpu.memory_space<semaphore_mem>> -> memref<1x!tpu.dma_semaphore, #tpu.memory_space<semaphore_mem>>
        %310 = tpu.memref_squeeze %309 : memref<1x!tpu.dma_semaphore, #tpu.memory_space<semaphore_mem>> -> memref<!tpu.dma_semaphore, #tpu.memory_space<semaphore_mem>>
        tpu.enqueue_dma source(%307 : memref<1x32xf32, #tpu.memory_space<any>>) target(%308 : memref<1x32xf32, #tpu.memory_space<vmem>>) target_semaphore(%310 : memref<!tpu.dma_semaphore, #tpu.memory_space<semaphore_mem>>)
        %311 = arith.addi %50, %286 : i32
        %c3_189 = arith.constant 3 : index
        %312 = arith.index_cast %311 : i32 to index
        %313 = memref.load %arg2[%c3_189, %312] : memref<4x16xi32, #tpu.memory_space<smem>>
        %c48_i32_190 = arith.constant 48 : i32
        %314 = arith.addi %c48_i32_190, %286 : i32
        %c0_i32_191 = arith.constant 0 : i32
        %c0_i32_192 = arith.constant 0 : i32
        %315 = tpu.memref_slice %arg3[%313, %c0_i32_192] : memref<32x32xf32, #tpu.memory_space<any>> -> memref<1x32xf32, #tpu.memory_space<any>>
        %c0_i32_193 = arith.constant 0 : i32
        %316 = tpu.memref_slice %arg7[%314, %c0_i32_193] : memref<128x32xf32, #tpu.memory_space<vmem>> -> memref<1x32xf32, #tpu.memory_space<vmem>>
        %317 = tpu.memref_slice %arg8[%c0_i32_191] : memref<2x!tpu.dma_semaphore, #tpu.memory_space<semaphore_mem>> -> memref<1x!tpu.dma_semaphore, #tpu.memory_space<semaphore_mem>>
        %318 = tpu.memref_squeeze %317 : memref<1x!tpu.dma_semaphore, #tpu.memory_space<semaphore_mem>> -> memref<!tpu.dma_semaphore, #tpu.memory_space<semaphore_mem>>
        tpu.enqueue_dma source(%315 : memref<1x32xf32, #tpu.memory_space<any>>) target(%316 : memref<1x32xf32, #tpu.memory_space<vmem>>) target_semaphore(%318 : memref<!tpu.dma_semaphore, #tpu.memory_space<semaphore_mem>>)
      }
      %c2_i32_28 = arith.constant 2 : i32
    } else {
    }
    %c2_i32 = arith.constant 2 : i32
    %c0_i32_1 = arith.constant 0 : i32
    %5 = arith.cmpi eq, %c2_i32, %c0_i32_1 : i32
    %c1_i32_2 = arith.constant 1 : i32
    %6 = arith.select %5, %c1_i32_2, %c2_i32 : i32
    %7 = arith.remsi %arg1, %6 : i32
    %c0_i32_3 = arith.constant 0 : i32
    %8 = arith.cmpi ne, %7, %c0_i32_3 : i32
    %c0_i32_4 = arith.constant 0 : i32
    %9 = arith.cmpi slt, %7, %c0_i32_4 : i32
    %c0_i32_5 = arith.constant 0 : i32
    %10 = arith.cmpi slt, %6, %c0_i32_5 : i32
    %11 = arith.xori %9, %10 : i1
    %12 = arith.andi %11, %8 : i1
    %13 = arith.addi %7, %6 : i32
    %14 = arith.select %12, %13, %7 : i32
    %c0_i32_6 = arith.constant 0 : i32
    %c8_i32 = arith.constant 8 : i32
    %15 = arith.addi %c0_i32_6, %c8_i32 : i32
    %c1_i32_7 = arith.constant 1 : i32
    scf.for %arg9 = %c0_i32_6 to %15 step %c1_i32_7  : i32 {
      %c0_i32_24 = arith.constant 0 : i32
      %c0_i32_25 = arith.constant 0 : i32
      %50 = tpu.memref_slice %arg3[%c0_i32_24, %c0_i32_25] : memref<32x32xf32, #tpu.memory_space<any>> -> memref<1x32xf32, #tpu.memory_space<any>>
      %c0_i32_26 = arith.constant 0 : i32
      %c0_i32_27 = arith.constant 0 : i32
      %51 = tpu.memref_slice %arg7[%c0_i32_26, %c0_i32_27] : memref<128x32xf32, #tpu.memory_space<vmem>> -> memref<1x32xf32, #tpu.memory_space<vmem>>
      %52 = tpu.memref_slice %arg8[%14] : memref<2x!tpu.dma_semaphore, #tpu.memory_space<semaphore_mem>> -> memref<1x!tpu.dma_semaphore, #tpu.memory_space<semaphore_mem>>
      %53 = tpu.memref_squeeze %52 : memref<1x!tpu.dma_semaphore, #tpu.memory_space<semaphore_mem>> -> memref<!tpu.dma_semaphore, #tpu.memory_space<semaphore_mem>>
      tpu.wait_dma2 semaphore(%53 : memref<!tpu.dma_semaphore, #tpu.memory_space<semaphore_mem>>) src(%50 : memref<1x32xf32, #tpu.memory_space<any>>) dst(%51 : memref<1x32xf32, #tpu.memory_space<vmem>>)
      %c0_i32_28 = arith.constant 0 : i32
      %c0_i32_29 = arith.constant 0 : i32
      %54 = tpu.memref_slice %arg3[%c0_i32_28, %c0_i32_29] : memref<32x32xf32, #tpu.memory_space<any>> -> memref<1x32xf32, #tpu.memory_space<any>>
      %c0_i32_30 = arith.constant 0 : i32
      %c0_i32_31 = arith.constant 0 : i32
      %55 = tpu.memref_slice %arg7[%c0_i32_30, %c0_i32_31] : memref<128x32xf32, #tpu.memory_space<vmem>> -> memref<1x32xf32, #tpu.memory_space<vmem>>
      %56 = tpu.memref_slice %arg8[%14] : memref<2x!tpu.dma_semaphore, #tpu.memory_space<semaphore_mem>> -> memref<1x!tpu.dma_semaphore, #tpu.memory_space<semaphore_mem>>
      %57 = tpu.memref_squeeze %56 : memref<1x!tpu.dma_semaphore, #tpu.memory_space<semaphore_mem>> -> memref<!tpu.dma_semaphore, #tpu.memory_space<semaphore_mem>>
      tpu.wait_dma2 semaphore(%57 : memref<!tpu.dma_semaphore, #tpu.memory_space<semaphore_mem>>) src(%54 : memref<1x32xf32, #tpu.memory_space<any>>) dst(%55 : memref<1x32xf32, #tpu.memory_space<vmem>>)
      %c0_i32_32 = arith.constant 0 : i32
      %c0_i32_33 = arith.constant 0 : i32
      %58 = tpu.memref_slice %arg3[%c0_i32_32, %c0_i32_33] : memref<32x32xf32, #tpu.memory_space<any>> -> memref<1x32xf32, #tpu.memory_space<any>>
      %c0_i32_34 = arith.constant 0 : i32
      %c0_i32_35 = arith.constant 0 : i32
      %59 = tpu.memref_slice %arg7[%c0_i32_34, %c0_i32_35] : memref<128x32xf32, #tpu.memory_space<vmem>> -> memref<1x32xf32, #tpu.memory_space<vmem>>
      %60 = tpu.memref_slice %arg8[%14] : memref<2x!tpu.dma_semaphore, #tpu.memory_space<semaphore_mem>> -> memref<1x!tpu.dma_semaphore, #tpu.memory_space<semaphore_mem>>
      %61 = tpu.memref_squeeze %60 : memref<1x!tpu.dma_semaphore, #tpu.memory_space<semaphore_mem>> -> memref<!tpu.dma_semaphore, #tpu.memory_space<semaphore_mem>>
      tpu.wait_dma2 semaphore(%61 : memref<!tpu.dma_semaphore, #tpu.memory_space<semaphore_mem>>) src(%58 : memref<1x32xf32, #tpu.memory_space<any>>) dst(%59 : memref<1x32xf32, #tpu.memory_space<vmem>>)
      %c0_i32_36 = arith.constant 0 : i32
      %c0_i32_37 = arith.constant 0 : i32
      %62 = tpu.memref_slice %arg3[%c0_i32_36, %c0_i32_37] : memref<32x32xf32, #tpu.memory_space<any>> -> memref<1x32xf32, #tpu.memory_space<any>>
      %c0_i32_38 = arith.constant 0 : i32
      %c0_i32_39 = arith.constant 0 : i32
      %63 = tpu.memref_slice %arg7[%c0_i32_38, %c0_i32_39] : memref<128x32xf32, #tpu.memory_space<vmem>> -> memref<1x32xf32, #tpu.memory_space<vmem>>
      %64 = tpu.memref_slice %arg8[%14] : memref<2x!tpu.dma_semaphore, #tpu.memory_space<semaphore_mem>> -> memref<1x!tpu.dma_semaphore, #tpu.memory_space<semaphore_mem>>
      %65 = tpu.memref_squeeze %64 : memref<1x!tpu.dma_semaphore, #tpu.memory_space<semaphore_mem>> -> memref<!tpu.dma_semaphore, #tpu.memory_space<semaphore_mem>>
      tpu.wait_dma2 semaphore(%65 : memref<!tpu.dma_semaphore, #tpu.memory_space<semaphore_mem>>) src(%62 : memref<1x32xf32, #tpu.memory_space<any>>) dst(%63 : memref<1x32xf32, #tpu.memory_space<vmem>>)
      %c0_i32_40 = arith.constant 0 : i32
      %c0_i32_41 = arith.constant 0 : i32
      %66 = tpu.memref_slice %arg3[%c0_i32_40, %c0_i32_41] : memref<32x32xf32, #tpu.memory_space<any>> -> memref<1x32xf32, #tpu.memory_space<any>>
      %c0_i32_42 = arith.constant 0 : i32
      %c0_i32_43 = arith.constant 0 : i32
      %67 = tpu.memref_slice %arg7[%c0_i32_42, %c0_i32_43] : memref<128x32xf32, #tpu.memory_space<vmem>> -> memref<1x32xf32, #tpu.memory_space<vmem>>
      %68 = tpu.memref_slice %arg8[%14] : memref<2x!tpu.dma_semaphore, #tpu.memory_space<semaphore_mem>> -> memref<1x!tpu.dma_semaphore, #tpu.memory_space<semaphore_mem>>
      %69 = tpu.memref_squeeze %68 : memref<1x!tpu.dma_semaphore, #tpu.memory_space<semaphore_mem>> -> memref<!tpu.dma_semaphore, #tpu.memory_space<semaphore_mem>>
      tpu.wait_dma2 semaphore(%69 : memref<!tpu.dma_semaphore, #tpu.memory_space<semaphore_mem>>) src(%66 : memref<1x32xf32, #tpu.memory_space<any>>) dst(%67 : memref<1x32xf32, #tpu.memory_space<vmem>>)
      %c0_i32_44 = arith.constant 0 : i32
      %c0_i32_45 = arith.constant 0 : i32
      %70 = tpu.memref_slice %arg3[%c0_i32_44, %c0_i32_45] : memref<32x32xf32, #tpu.memory_space<any>> -> memref<1x32xf32, #tpu.memory_space<any>>
      %c0_i32_46 = arith.constant 0 : i32
      %c0_i32_47 = arith.constant 0 : i32
      %71 = tpu.memref_slice %arg7[%c0_i32_46, %c0_i32_47] : memref<128x32xf32, #tpu.memory_space<vmem>> -> memref<1x32xf32, #tpu.memory_space<vmem>>
      %72 = tpu.memref_slice %arg8[%14] : memref<2x!tpu.dma_semaphore, #tpu.memory_space<semaphore_mem>> -> memref<1x!tpu.dma_semaphore, #tpu.memory_space<semaphore_mem>>
      %73 = tpu.memref_squeeze %72 : memref<1x!tpu.dma_semaphore, #tpu.memory_space<semaphore_mem>> -> memref<!tpu.dma_semaphore, #tpu.memory_space<semaphore_mem>>
      tpu.wait_dma2 semaphore(%73 : memref<!tpu.dma_semaphore, #tpu.memory_space<semaphore_mem>>) src(%70 : memref<1x32xf32, #tpu.memory_space<any>>) dst(%71 : memref<1x32xf32, #tpu.memory_space<vmem>>)
      %c0_i32_48 = arith.constant 0 : i32
      %c0_i32_49 = arith.constant 0 : i32
      %74 = tpu.memref_slice %arg3[%c0_i32_48, %c0_i32_49] : memref<32x32xf32, #tpu.memory_space<any>> -> memref<1x32xf32, #tpu.memory_space<any>>
      %c0_i32_50 = arith.constant 0 : i32
      %c0_i32_51 = arith.constant 0 : i32
      %75 = tpu.memref_slice %arg7[%c0_i32_50, %c0_i32_51] : memref<128x32xf32, #tpu.memory_space<vmem>> -> memref<1x32xf32, #tpu.memory_space<vmem>>
      %76 = tpu.memref_slice %arg8[%14] : memref<2x!tpu.dma_semaphore, #tpu.memory_space<semaphore_mem>> -> memref<1x!tpu.dma_semaphore, #tpu.memory_space<semaphore_mem>>
      %77 = tpu.memref_squeeze %76 : memref<1x!tpu.dma_semaphore, #tpu.memory_space<semaphore_mem>> -> memref<!tpu.dma_semaphore, #tpu.memory_space<semaphore_mem>>
      tpu.wait_dma2 semaphore(%77 : memref<!tpu.dma_semaphore, #tpu.memory_space<semaphore_mem>>) src(%74 : memref<1x32xf32, #tpu.memory_space<any>>) dst(%75 : memref<1x32xf32, #tpu.memory_space<vmem>>)
      %c0_i32_52 = arith.constant 0 : i32
      %c0_i32_53 = arith.constant 0 : i32
      %78 = tpu.memref_slice %arg3[%c0_i32_52, %c0_i32_53] : memref<32x32xf32, #tpu.memory_space<any>> -> memref<1x32xf32, #tpu.memory_space<any>>
      %c0_i32_54 = arith.constant 0 : i32
      %c0_i32_55 = arith.constant 0 : i32
      %79 = tpu.memref_slice %arg7[%c0_i32_54, %c0_i32_55] : memref<128x32xf32, #tpu.memory_space<vmem>> -> memref<1x32xf32, #tpu.memory_space<vmem>>
      %80 = tpu.memref_slice %arg8[%14] : memref<2x!tpu.dma_semaphore, #tpu.memory_space<semaphore_mem>> -> memref<1x!tpu.dma_semaphore, #tpu.memory_space<semaphore_mem>>
      %81 = tpu.memref_squeeze %80 : memref<1x!tpu.dma_semaphore, #tpu.memory_space<semaphore_mem>> -> memref<!tpu.dma_semaphore, #tpu.memory_space<semaphore_mem>>
      tpu.wait_dma2 semaphore(%81 : memref<!tpu.dma_semaphore, #tpu.memory_space<semaphore_mem>>) src(%78 : memref<1x32xf32, #tpu.memory_space<any>>) dst(%79 : memref<1x32xf32, #tpu.memory_space<vmem>>)
    }
    %c64_i32 = arith.constant 64 : i32
    %16 = arith.muli %14, %c64_i32 : i32
    %17 = tpu.assume_multiple %16, 8 : i32
    %18 = arith.index_cast %17 : i32 to index
    %c0 = arith.constant 0 : index
    %19 = vector.load %arg7[%18, %c0] : memref<128x32xf32, #tpu.memory_space<vmem>>, vector<16x32xf32>
    %c16_i32 = arith.constant 16 : i32
    %20 = arith.addi %17, %c16_i32 : i32
    %21 = tpu.assume_multiple %20, 8 : i32
    %22 = arith.index_cast %21 : i32 to index
    %c0_8 = arith.constant 0 : index
    %23 = vector.load %arg7[%22, %c0_8] : memref<128x32xf32, #tpu.memory_space<vmem>>, vector<16x32xf32>
    %c32_i32 = arith.constant 32 : i32
    %24 = arith.addi %17, %c32_i32 : i32
    %25 = tpu.assume_multiple %24, 8 : i32
    %26 = arith.index_cast %25 : i32 to index
    %c0_9 = arith.constant 0 : index
    %27 = vector.load %arg7[%26, %c0_9] : memref<128x32xf32, #tpu.memory_space<vmem>>, vector<16x32xf32>
    %c48_i32 = arith.constant 48 : i32
    %28 = arith.addi %17, %c48_i32 : i32
    %29 = tpu.assume_multiple %28, 8 : i32
    %30 = arith.index_cast %29 : i32 to index
    %c0_10 = arith.constant 0 : index
    %31 = vector.load %arg7[%30, %c0_10] : memref<128x32xf32, #tpu.memory_space<vmem>>, vector<16x32xf32>
    %32 = arith.addf %19, %23 : vector<16x32xf32>
    %33 = arith.addf %27, %31 : vector<16x32xf32>
    %c0_11 = arith.constant 0 : index
    %c0_12 = arith.constant 0 : index
    %c0_13 = arith.constant 0 : index
    %34 = vector.load %arg4[%c0_11, %c0_12, %c0_13] : memref<3x32x128xf32, #tpu.memory_space<vmem>>, vector<1x32x128xf32>
    %35 = vector.shape_cast %34 : vector<1x32x128xf32> to vector<32x128xf32>
    %cst = arith.constant dense<0.000000e+00> : vector<16x128xf32>
    %36 = tpu.matmul %32, %35, %cst {dimension_numbers = #tpu.dot_dimension_numbers<[1], [0], [0], [1], [0, 0, 1, 1], [], []>} : vector<16x32xf32>, vector<32x128xf32>, vector<16x128xf32> -> vector<16x128xf32>
    %c1 = arith.constant 1 : index
    %c0_14 = arith.constant 0 : index
    %c0_15 = arith.constant 0 : index
    %37 = vector.load %arg4[%c1, %c0_14, %c0_15] : memref<3x32x128xf32, #tpu.memory_space<vmem>>, vector<1x32x128xf32>
    %38 = vector.shape_cast %37 : vector<1x32x128xf32> to vector<32x128xf32>
    %cst_16 = arith.constant dense<0.000000e+00> : vector<16x128xf32>
    %39 = tpu.matmul %33, %38, %cst_16 {dimension_numbers = #tpu.dot_dimension_numbers<[1], [0], [0], [1], [0, 0, 1, 1], [], []>} : vector<16x32xf32>, vector<32x128xf32>, vector<16x128xf32> -> vector<16x128xf32>
    %40 = arith.addf %36, %39 : vector<16x128xf32>
    %41 = arith.mulf %32, %33 : vector<16x32xf32>
    %c2 = arith.constant 2 : index
    %c0_17 = arith.constant 0 : index
    %c0_18 = arith.constant 0 : index
    %42 = vector.load %arg4[%c2, %c0_17, %c0_18] : memref<3x32x128xf32, #tpu.memory_space<vmem>>, vector<1x32x128xf32>
    %43 = vector.shape_cast %42 : vector<1x32x128xf32> to vector<32x128xf32>
    %cst_19 = arith.constant dense<0.000000e+00> : vector<16x128xf32>
    %44 = tpu.matmul %41, %43, %cst_19 {dimension_numbers = #tpu.dot_dimension_numbers<[1], [0], [0], [1], [0, 0, 1, 1], [], []>} : vector<16x32xf32>, vector<32x128xf32>, vector<16x128xf32> -> vector<16x128xf32>
    %45 = arith.addf %40, %44 : vector<16x128xf32>
    %c0_20 = arith.constant 0 : index
    %c0_21 = arith.constant 0 : index
    %46 = vector.load %arg5[%c0_20, %c0_21] : memref<1x128xf32, #tpu.memory_space<vmem>>, vector<1x128xf32>
    %47 = vector.broadcast %46 : vector<1x128xf32> to vector<16x128xf32>
    %48 = arith.addf %45, %47 : vector<16x128xf32>
    %c0_22 = arith.constant 0 : index
    %c0_23 = arith.constant 0 : index
    %49 = vector.load %arg6[%c0_22, %c0_23] : memref<16x128xf32, #tpu.memory_space<vmem>>, vector<16x128xf32>
    tpu.vector_store %arg6[%c0_22, %c0_23], %48 {strides = array<i32>} : memref<16x128xf32, #tpu.memory_space<vmem>>, vector<16x128xf32>,
    return
  }
  func.func @transform_1(%arg0: i32, %arg1: i32, %arg2: memref<4x16xi32, #tpu.memory_space<smem>>) -> (i32, i32, i32) {
    %c0_i32 = arith.constant 0 : i32
    %c0_i32_0 = arith.constant 0 : i32
    %c0_i32_1 = arith.constant 0 : i32
    %c0_i32_2 = arith.constant 0 : i32
    return %c0_i32, %c0_i32_0, %c0_i32_1 : i32, i32, i32
  }
  func.func @transform_2(%arg0: i32, %arg1: i32, %arg2: memref<4x16xi32, #tpu.memory_space<smem>>) -> (i32, i32) {
    %c0_i32 = arith.constant 0 : i32
    %c0_i32_0 = arith.constant 0 : i32
    %c0_i32_1 = arith.constant 0 : i32
    return %c0_i32, %c0_i32_0 : i32, i32
  }
  func.func @transform_3(%arg0: i32, %arg1: i32, %arg2: memref<4x16xi32, #tpu.memory_space<smem>>) -> (i32, i32) {
    %c1_i32 = arith.constant 1 : i32
    %0 = arith.muli %arg0, %c1_i32 : i32
    %1 = arith.addi %0, %arg1 : i32
    %c0_i32 = arith.constant 0 : i32
    %c0_i32_0 = arith.constant 0 : i32
    return %1, %c0_i32 : i32, i32
  }
}

</mosaic_0001>

<llo_original>
// kernel: tpu_custom_call.1
$region0: #{tpu_custom_call.1}
  #allocation0 [shape = 'u32[]', space=smem, size = 0x4, offset = 0x4, fixed_abs, tag = 'smem constant byte address 0x4 - core index']
  #allocation1 [shape = 'u32[72,128]{1,0:T(1,128)}', space=vmem, size = 0x9000, scoped, tag = 'internal scratch']
  #allocation2 [shape = 'f32[128,32]{1,0:T(8,128)}', space=vmem, size = 0x10000, scoped, tag = 'scratch operand']
  #allocation3 [shape = 's32[2]{0}', space=sflag, size = 0x8, scoped, tag = 'scratch operand']
  #allocation4 [shape = 's32[1]{0}', space=sflag, size = 0x4, scoped, tag = 'scoped memory for tpu_custom_call.1']
  #allocation5 [shape = 'u8[2048]{0}', space=smem, size = 0x800, scoped, tag = 'prefetched SMEM operand 0']
  #allocation10 [shape = 's32[]', space=sflag, size = 0x4, offset = 0, fixed_abs, tag = 'sflag constant byte address 0x0 - dummy sync flag']
  #allocation11 [shape = 's32[]', space=sflag, size = 0x4, offset = 0, fixed_abs, tag = 'sflag constant byte address 0x0 - dummy sync flag']
  #allocation12 [shape = 'u32[]', space=smem, size = 0x4, offset = 0x44, fixed_abs, tag = 'smem constant byte address 0x44 - assertion arg 0']
  #allocation13 [shape = 'u32[]', space=smem, size = 0x4, offset = 0x48, fixed_abs, tag = 'smem constant byte address 0x48 - assertion arg 1']
  #allocation14 [shape = 's32[]', space=sflag, size = 0x4, offset = 0, fixed_abs, tag = 'sflag constant byte address 0x0 - dummy sync flag']
  #allocation15 [shape = 's32[]', space=sflag, size = 0x4, offset = 0, fixed_abs, tag = 'sflag constant byte address 0x0 - dummy sync flag']
  #allocation16 [shape = 's32[]', space=sflag, size = 0x4, offset = 0, fixed_abs, tag = 'sflag constant byte address 0x0 - dummy sync flag']
  #allocation17 [shape = 's32[]', space=sflag, size = 0x4, offset = 0, fixed_abs, tag = 'sflag constant byte address 0x0 - dummy sync flag']
  #allocation18 [shape = 's32[]', space=sflag, size = 0x4, offset = 0, fixed_abs, tag = 'sflag constant byte address 0x0 - dummy sync flag']
  #allocation19 [shape = 's32[]', space=sflag, size = 0x4, offset = 0, fixed_abs, tag = 'sflag constant byte address 0x0 - dummy sync flag']
  #allocation20 [shape = 's32[]', space=sflag, size = 0x4, offset = 0, fixed_abs, tag = 'sflag constant byte address 0x0 - dummy sync flag']
  #allocation21 [shape = 's32[]', space=sflag, size = 0x4, offset = 0, fixed_abs, tag = 'sflag constant byte address 0x0 - dummy sync flag']
  #allocation22 [shape = 's32[]', space=sflag, size = 0x4, offset = 0, fixed_abs, tag = 'sflag constant byte address 0x0 - dummy sync flag']
  #allocation23 [shape = 's32[]', space=sflag, size = 0x4, offset = 0, fixed_abs, tag = 'sflag constant byte address 0x0 - dummy sync flag']
  #allocation24 [shape = 's32[]', space=sflag, size = 0x4, offset = 0, fixed_abs, tag = 'sflag constant byte address 0x0 - dummy sync flag']
  #allocation25 [shape = 's32[]', space=sflag, size = 0x4, offset = 0, fixed_abs, tag = 'sflag constant byte address 0x0 - dummy sync flag']
  #allocation26 [shape = 's32[]', space=sflag, size = 0x4, offset = 0, fixed_abs, tag = 'sflag constant byte address 0x0 - dummy sync flag']
  #allocation27 [shape = 's32[]', space=sflag, size = 0x4, offset = 0, fixed_abs, tag = 'sflag constant byte address 0x0 - dummy sync flag']
  #allocation28 [shape = 's32[]', space=sflag, size = 0x4, offset = 0, fixed_abs, tag = 'sflag constant byte address 0x0 - dummy sync flag']
  #allocation29 [shape = 's32[]', space=sflag, size = 0x4, offset = 0, fixed_abs, tag = 'sflag constant byte address 0x0 - dummy sync flag']
  #allocation30 [shape = 's32[]', space=sflag, size = 0x4, offset = 0, fixed_abs, tag = 'sflag constant byte address 0x0 - dummy sync flag']
  #allocation31 [shape = 's32[]', space=sflag, size = 0x4, offset = 0, fixed_abs, tag = 'sflag constant byte address 0x0 - dummy sync flag']
  #allocation32 [shape = 's32[]', space=sflag, size = 0x4, offset = 0, fixed_abs, tag = 'sflag constant byte address 0x0 - dummy sync flag']
  #allocation33 [shape = 's32[]', space=sflag, size = 0x4, offset = 0, fixed_abs, tag = 'sflag constant byte address 0x0 - dummy sync flag']
  #allocation34 [shape = 's32[]', space=sflag, size = 0x4, offset = 0, fixed_abs, tag = 'sflag constant byte address 0x0 - dummy sync flag']
  #allocation35 [shape = 's32[]', space=sflag, size = 0x4, offset = 0, fixed_abs, tag = 'sflag constant byte address 0x0 - dummy sync flag']
  #allocation36 [shape = 's32[]', space=sflag, size = 0x4, offset = 0, fixed_abs, tag = 'sflag constant byte address 0x0 - dummy sync flag']
  #allocation37 [shape = 's32[]', space=sflag, size = 0x4, offset = 0, fixed_abs, tag = 'sflag constant byte address 0x0 - dummy sync flag']
  #allocation38 [shape = 's32[]', space=sflag, size = 0x4, offset = 0, fixed_abs, tag = 'sflag constant byte address 0x0 - dummy sync flag']
  #allocation39 [shape = 's32[]', space=sflag, size = 0x4, offset = 0, fixed_abs, tag = 'sflag constant byte address 0x0 - dummy sync flag']
  #allocation40 [shape = 's32[]', space=sflag, size = 0x4, offset = 0, fixed_abs, tag = 'sflag constant byte address 0x0 - dummy sync flag']
  #allocation41 [shape = 's32[]', space=sflag, size = 0x4, offset = 0, fixed_abs, tag = 'sflag constant byte address 0x0 - dummy sync flag']
  #allocation42 [shape = 's32[]', space=sflag, size = 0x4, offset = 0, fixed_abs, tag = 'sflag constant byte address 0x0 - dummy sync flag']
  #allocation43 [shape = 's32[]', space=sflag, size = 0x4, offset = 0, fixed_abs, tag = 'sflag constant byte address 0x0 - dummy sync flag']
  #allocation44 [shape = 's32[]', space=sflag, size = 0x4, offset = 0, fixed_abs, tag = 'sflag constant byte address 0x0 - dummy sync flag']
  #allocation45 [shape = 's32[]', space=sflag, size = 0x4, offset = 0, fixed_abs, tag = 'sflag constant byte address 0x0 - dummy sync flag']
  #allocation46 [shape = 's32[]', space=sflag, size = 0x4, offset = 0, fixed_abs, tag = 'sflag constant byte address 0x0 - dummy sync flag']
  #allocation47 [shape = 's32[]', space=sflag, size = 0x4, offset = 0, fixed_abs, tag = 'sflag constant byte address 0x0 - dummy sync flag']
  #allocation48 [shape = 's32[]', space=sflag, size = 0x4, offset = 0, fixed_abs, tag = 'sflag constant byte address 0x0 - dummy sync flag']
  #allocation49 [shape = 's32[]', space=sflag, size = 0x4, offset = 0, fixed_abs, tag = 'sflag constant byte address 0x0 - dummy sync flag']
  #allocation50 [shape = 's32[]', space=sflag, size = 0x4, offset = 0, fixed_abs, tag = 'sflag constant byte address 0x0 - dummy sync flag']
  #allocation51 [shape = 's32[]', space=sflag, size = 0x4, offset = 0, fixed_abs, tag = 'sflag constant byte address 0x0 - dummy sync flag']
  #allocation52 [shape = 's32[]', space=sflag, size = 0x4, offset = 0, fixed_abs, tag = 'sflag constant byte address 0x0 - dummy sync flag']
  #allocation53 [shape = 's32[]', space=sflag, size = 0x4, offset = 0, fixed_abs, tag = 'sflag constant byte address 0x0 - dummy sync flag']
  #allocation54 [shape = 's32[]', space=sflag, size = 0x4, offset = 0, fixed_abs, tag = 'sflag constant byte address 0x0 - dummy sync flag']
  #allocation55 [shape = 's32[]', space=sflag, size = 0x4, offset = 0, fixed_abs, tag = 'sflag constant byte address 0x0 - dummy sync flag']
  #allocation56 [shape = 's32[]', space=sflag, size = 0x4, offset = 0, fixed_abs, tag = 'sflag constant byte address 0x0 - dummy sync flag']
  #allocation57 [shape = 's32[]', space=sflag, size = 0x4, offset = 0, fixed_abs, tag = 'sflag constant byte address 0x0 - dummy sync flag']
  #allocation58 [shape = 's32[]', space=sflag, size = 0x4, offset = 0, fixed_abs, tag = 'sflag constant byte address 0x0 - dummy sync flag']
  #allocation59 [shape = 's32[]', space=sflag, size = 0x4, offset = 0, fixed_abs, tag = 'sflag constant byte address 0x0 - dummy sync flag']
  #allocation60 [shape = 's32[]', space=sflag, size = 0x4, offset = 0, fixed_abs, tag = 'sflag constant byte address 0x0 - dummy sync flag']
  #allocation61 [shape = 's32[]', space=sflag, size = 0x4, offset = 0, fixed_abs, tag = 'sflag constant byte address 0x0 - dummy sync flag']
  #allocation62 [shape = 's32[]', space=sflag, size = 0x4, offset = 0, fixed_abs, tag = 'sflag constant byte address 0x0 - dummy sync flag']
  #allocation63 [shape = 's32[]', space=sflag, size = 0x4, offset = 0, fixed_abs, tag = 'sflag constant byte address 0x0 - dummy sync flag']
  #allocation64 [shape = 's32[]', space=sflag, size = 0x4, offset = 0, fixed_abs, tag = 'sflag constant byte address 0x0 - dummy sync flag']
  #allocation65 [shape = 's32[]', space=sflag, size = 0x4, offset = 0, fixed_abs, tag = 'sflag constant byte address 0x0 - dummy sync flag']
  #allocation66 [shape = 's32[]', space=sflag, size = 0x4, offset = 0, fixed_abs, tag = 'sflag constant byte address 0x0 - dummy sync flag']
  #allocation67 [shape = 's32[]', space=sflag, size = 0x4, offset = 0, fixed_abs, tag = 'sflag constant byte address 0x0 - dummy sync flag']
  #allocation68 [shape = 's32[]', space=sflag, size = 0x4, offset = 0, fixed_abs, tag = 'sflag constant byte address 0x0 - dummy sync flag']
  #allocation69 [shape = 's32[]', space=sflag, size = 0x4, offset = 0, fixed_abs, tag = 'sflag constant byte address 0x0 - dummy sync flag']
  #allocation70 [shape = 's32[]', space=sflag, size = 0x4, offset = 0, fixed_abs, tag = 'sflag constant byte address 0x0 - dummy sync flag']
  #allocation71 [shape = 's32[]', space=sflag, size = 0x4, offset = 0, fixed_abs, tag = 'sflag constant byte address 0x0 - dummy sync flag']
  #allocation72 [shape = 's32[]', space=sflag, size = 0x4, offset = 0, fixed_abs, tag = 'sflag constant byte address 0x0 - dummy sync flag']
  #allocation73 [shape = 's32[]', space=sflag, size = 0x4, offset = 0, fixed_abs, tag = 'sflag constant byte address 0x0 - dummy sync flag']
  #allocation74 [shape = 's32[]', space=sflag, size = 0x4, offset = 0, fixed_abs, tag = 'sflag constant byte address 0x0 - dummy sync flag']
  #allocation75 [shape = 's32[]', space=sflag, size = 0x4, offset = 0, fixed_abs, tag = 'sflag constant byte address 0x0 - dummy sync flag']
  %s0 = inlined_call_operand.hbm [shape: s32[4,16], index: 0, kind: input, shape index: {}]
  %s1 = inlined_call_operand.hbm [shape: f32[32,32], index: 1, kind: input, shape index: {}]
  %s2 = inlined_call_operand.hbm [shape: f32[3,32,128], index: 2, kind: input, shape index: {}]
  %s3 = inlined_call_operand.vmem [shape: f32[1,128], index: 3, kind: input, shape index: {}]
  %s4 = inlined_call_operand.hbm [shape: f32[16,128], index: 4, kind: output, shape index: {}]
  %s5 = sld [smem:[#allocation0]]
  $region168: #{tpu_custom_call.1} parent=0
    _
  %s7 = ssub.s32 1, %s5
  %s8 = scalar_select 0, %s7, %s5
  %s10 = sshll.u32 %s0, 4
  %s11 = int_to_ptr.hbm [resolvable:$true] %s10
  %13 = dma.hbm_to_smem %s11, 64, [#allocation5], [#allocation4]
  %15 = dma.done [#allocation4], 64
  %16 = sfence
  $region1: #{tpu_custom_call.1} parent=0
    #allocation6 [shape = 'u8[49152]{0}', space=vmem, size = 0xc000, scoped, tag = 'input window, operand 2, single buffered']
    #allocation7 [shape = 's32[1]{0}', space=sflag, size = 0x4, scoped, tag = 'scoped memory for tpu_custom_call.1']
    #allocation8 [shape = 's32[1]{0}', space=sflag, size = 0x4, scoped, tag = 'scoped memory for tpu_custom_call.1']
    #allocation9 [shape = 'u8[8192]{0}', space=vmem, size = 0x2000, scoped, tag = 'output window, operand 0, single buffered']
    %17 = vsyncpa [#allocation7], 0
    %18 = vsyncpa [#allocation8], 0
    // Predicated region
    $region2: #{tpu_custom_call.1} parent=1 // pred_check
      _
    $region3: #{tpu_custom_call.1} parent=1 // pred_check_branch
      %20 = sbr.rel (0) target = $region5
    $region4: #{tpu_custom_call.1} parent=1 // pred_region
      %22 = vsyncadd [#allocation7], 0
      %s23 = sshll.u32 %s2, 4
      %s24 = int_to_ptr.hbm [resolvable:$true] %s23
      %s25 = sshll.u32 [#allocation6], 4
      %s26 = int_to_ptr.vmem [resolvable:$true] %s25
      %31 = dma.hbm_to_vmem [thread:$0]  %s24, 1536, %s26, [#allocation7], 128, 128, 8
    $region5: #{tpu_custom_call.1} parent=1 // pred_fallthru
      _
    // Predicated region
    $region6: #{tpu_custom_call.1} parent=1 // pred_check
      _
    $region7: #{tpu_custom_call.1} parent=1 // pred_check_branch
      %33 = sbr.rel (0) target = $region9
    $region8: #{tpu_custom_call.1} parent=1 // pred_region
      _
    $region9: #{tpu_custom_call.1} parent=1 // pred_fallthru
      _
    // Predicated region
    $region10: #{tpu_custom_call.1} parent=1 // pred_check
      _
    $region11: #{tpu_custom_call.1} parent=1 // pred_check_branch
      %35 = sbr.rel (0) target = $region13
    $region12: #{tpu_custom_call.1} parent=1 // pred_region
      %37 = dma.done [#allocation7], 1536
    $region13: #{tpu_custom_call.1} parent=1 // pred_fallthru
      _
    %s38 = sadd.s32 0, 0
    %s39 = smul.u32 2, %s38
    %s40 = sadd.s32 0, 0
    %p41 = scmp.eq.s32.totalorder 0, 0
    // Predicated region
    $region14: #{tpu_custom_call.1} parent=1 // pred_check
      %p42 = pneg %p41
    $region15: #{tpu_custom_call.1} parent=1 // pred_check_branch
      %44 = sbr.rel (%p42) target = $region17
    $region16: #{tpu_custom_call.1} parent=1 // pred_region
      %s45 = smul.u32 %s40, 16
      loop: start=0, step=1, limit=2
      $region18: #{tpu_custom_call.1} parent=16 // loop_pre_header
        _
      $region19: #{tpu_custom_call.1} parent=16 // loop_header
        %s47 = sphi 0, %s51
        %p48 = scmp.ge.s32.totalorder %s47, 2
      $region20: #{tpu_custom_call.1} parent=16 // loop_header_branch
        %50 = sbr.rel (%p48) target = $region24
      $region21: #{tpu_custom_call.1} parent=16 // loop_body
        %s52 = smul.u32 %s47, 8
        %s53 = sadd.s32 %s45, %s52
        %s54 = sld [smem:[#allocation5 + %s53]]
        %s55 = scalar_lea.hbm %s1, %s54
        %s56 = scalar_lea.vmem [#allocation2], %s52
        // Predicated region
        $region25: #{tpu_custom_call.1} parent=21 // pred_check
          _
        $region26: #{tpu_custom_call.1} parent=21 // pred_check_branch
          %58 = sbr.rel target = $region28
        $region27: #{tpu_custom_call.1} parent=21 // pred_region
          %59 = sst [smem:[#allocation12]] [#allocation11]
          %60 = sst [smem:[#allocation13]] [#allocation10]
        $region28: #{tpu_custom_call.1} parent=21 // pred_fallthru
          _
        %62 = shalt.err (0)
        %s64 = sshll.u32 %s55, 4
        %s65 = int_to_ptr.hbm [resolvable:$true] %s64
        %s66 = sshll.u32 %s56, 4
        %s67 = int_to_ptr.vmem [resolvable:$true] %s66
        %69 = dma.hbm_to_vmem [thread:$0]  %s65, 16, %s67, [#allocation3]
        %s70 = sshra.s32 %s53, 7
        %s71 = sand.u32 %s53, 127
        %s72 = sadd.s32 %s70, 1
        %s73 = smul.u32 %s72, 128
        %s74 = sshra.s32 %s53, 7
        %s75 = sand.u32 %s53, 127
        %s76 = sadd.s32 %s73, %s75
        %s77 = sld [smem:[#allocation5 + %s76]]
        %s78 = sadd.s32 %s52, 16
        %s79 = scalar_lea.hbm %s1, %s77
        %s80 = scalar_lea.vmem [#allocation2], %s78
        // Predicated region
        $region29: #{tpu_custom_call.1} parent=21 // pred_check
          _
        $region30: #{tpu_custom_call.1} parent=21 // pred_check_branch
          %82 = sbr.rel target = $region32
        $region31: #{tpu_custom_call.1} parent=21 // pred_region
          %83 = sst [smem:[#allocation12]] [#allocation15]
          %84 = sst [smem:[#allocation13]] [#allocation14]
        $region32: #{tpu_custom_call.1} parent=21 // pred_fallthru
          _
        %86 = shalt.err (0)
        %s88 = sshll.u32 %s79, 4
        %s89 = int_to_ptr.hbm [resolvable:$true] %s88
        %s90 = sshll.u32 %s80, 4
        %s91 = int_to_ptr.vmem [resolvable:$true] %s90
        %93 = dma.hbm_to_vmem [thread:$0]  %s89, 16, %s91, [#allocation3]
        %s94 = sadd.s32 %s70, 2
        %s95 = smul.u32 %s94, 128
        %s96 = sadd.s32 %s95, %s75
        %s97 = sld [smem:[#allocation5 + %s96]]
        %s98 = sadd.s32 %s52, 32
        %s99 = scalar_lea.hbm %s1, %s97
        %s100 = scalar_lea.vmem [#allocation2], %s98
        // Predicated region
        $region33: #{tpu_custom_call.1} parent=21 // pred_check
          _
        $region34: #{tpu_custom_call.1} parent=21 // pred_check_branch
          %102 = sbr.rel target = $region36
        $region35: #{tpu_custom_call.1} parent=21 // pred_region
          %103 = sst [smem:[#allocation12]] [#allocation17]
          %104 = sst [smem:[#allocation13]] [#allocation16]
        $region36: #{tpu_custom_call.1} parent=21 // pred_fallthru
          _
        %106 = shalt.err (0)
        %s108 = sshll.u32 %s99, 4
        %s109 = int_to_ptr.hbm [resolvable:$true] %s108
        %s110 = sshll.u32 %s100, 4
        %s111 = int_to_ptr.vmem [resolvable:$true] %s110
        %113 = dma.hbm_to_vmem [thread:$0]  %s109, 16, %s111, [#allocation3]
        %s114 = sadd.s32 %s70, 3
        %s115 = smul.u32 %s114, 128
        %s116 = sadd.s32 %s115, %s75
        %s117 = sld [smem:[#allocation5 + %s116]]
        %s118 = sadd.s32 %s52, 48
        %s119 = scalar_lea.hbm %s1, %s117
        %s120 = scalar_lea.vmem [#allocation2], %s118
        // Predicated region
        $region37: #{tpu_custom_call.1} parent=21 // pred_check
          _
        $region38: #{tpu_custom_call.1} parent=21 // pred_check_branch
          %122 = sbr.rel target = $region40
        $region39: #{tpu_custom_call.1} parent=21 // pred_region
          %123 = sst [smem:[#allocation12]] [#allocation19]
          %124 = sst [smem:[#allocation13]] [#allocation18]
        $region40: #{tpu_custom_call.1} parent=21 // pred_fallthru
          _
        %126 = shalt.err (0)
        %s128 = sshll.u32 %s119, 4
        %s129 = int_to_ptr.hbm [resolvable:$true] %s128
        %s130 = sshll.u32 %s120, 4
        %s131 = int_to_ptr.vmem [resolvable:$true] %s130
        %133 = dma.hbm_to_vmem [thread:$0]  %s129, 16, %s131, [#allocation3]
        %s134 = sadd.s32 %s52, 1
        %s135 = sadd.s32 %s45, %s134
        %s136 = sld [smem:[#allocation5 + %s135]]
        %s137 = scalar_lea.hbm %s1, %s136
        %s138 = scalar_lea.vmem [#allocation2], %s134
        // Predicated region
        $region41: #{tpu_custom_call.1} parent=21 // pred_check
          _
        $region42: #{tpu_custom_call.1} parent=21 // pred_check_branch
          %140 = sbr.rel target = $region44
        $region43: #{tpu_custom_call.1} parent=21 // pred_region
          %141 = sst [smem:[#allocation12]] [#allocation21]
          %142 = sst [smem:[#allocation13]] [#allocation20]
        $region44: #{tpu_custom_call.1} parent=21 // pred_fallthru
          _
        %144 = shalt.err (0)
        %s146 = sshll.u32 %s137, 4
        %s147 = int_to_ptr.hbm [resolvable:$true] %s146
        %s148 = sshll.u32 %s138, 4
        %s149 = int_to_ptr.vmem [resolvable:$true] %s148
        %151 = dma.hbm_to_vmem [thread:$0]  %s147, 16, %s149, [#allocation3]
        %s152 = sshra.s32 %s135, 7
        %s153 = sand.u32 %s135, 127
        %s154 = sadd.s32 %s152, 1
        %s155 = smul.u32 %s154, 128
        %s156 = sshra.s32 %s135, 7
        %s157 = sand.u32 %s135, 127
        %s158 = sadd.s32 %s155, %s157
        %s159 = sld [smem:[#allocation5 + %s158]]
        %s160 = sadd.s32 %s52, 17
        %s161 = scalar_lea.hbm %s1, %s159
        %s162 = scalar_lea.vmem [#allocation2], %s160
        // Predicated region
        $region45: #{tpu_custom_call.1} parent=21 // pred_check
          _
        $region46: #{tpu_custom_call.1} parent=21 // pred_check_branch
          %164 = sbr.rel target = $region48
        $region47: #{tpu_custom_call.1} parent=21 // pred_region
          %165 = sst [smem:[#allocation12]] [#allocation23]
          %166 = sst [smem:[#allocation13]] [#allocation22]
        $region48: #{tpu_custom_call.1} parent=21 // pred_fallthru
          _
        %168 = shalt.err (0)
        %s170 = sshll.u32 %s161, 4
        %s171 = int_to_ptr.hbm [resolvable:$true] %s170
        %s172 = sshll.u32 %s162, 4
        %s173 = int_to_ptr.vmem [resolvable:$true] %s172
        %175 = dma.hbm_to_vmem [thread:$0]  %s171, 16, %s173, [#allocation3]
        %s176 = sadd.s32 %s152, 2
        %s177 = smul.u32 %s176, 128
        %s178 = sadd.s32 %s177, %s157
        %s179 = sld [smem:[#allocation5 + %s178]]
        %s180 = sadd.s32 %s52, 33
        %s181 = scalar_lea.hbm %s1, %s179
        %s182 = scalar_lea.vmem [#allocation2], %s180
        // Predicated region
        $region49: #{tpu_custom_call.1} parent=21 // pred_check
          _
        $region50: #{tpu_custom_call.1} parent=21 // pred_check_branch
          %184 = sbr.rel target = $region52
        $region51: #{tpu_custom_call.1} parent=21 // pred_region
          %185 = sst [smem:[#allocation12]] [#allocation25]
          %186 = sst [smem:[#allocation13]] [#allocation24]
        $region52: #{tpu_custom_call.1} parent=21 // pred_fallthru
          _
        %188 = shalt.err (0)
        %s190 = sshll.u32 %s181, 4
        %s191 = int_to_ptr.hbm [resolvable:$true] %s190
        %s192 = sshll.u32 %s182, 4
        %s193 = int_to_ptr.vmem [resolvable:$true] %s192
        %195 = dma.hbm_to_vmem [thread:$0]  %s191, 16, %s193, [#allocation3]
        %s196 = sadd.s32 %s152, 3
        %s197 = smul.u32 %s196, 128
        %s198 = sadd.s32 %s197, %s157
        %s199 = sld [smem:[#allocation5 + %s198]]
        %s200 = sadd.s32 %s52, 49
        %s201 = scalar_lea.hbm %s1, %s199
        %s202 = scalar_lea.vmem [#allocation2], %s200
        // Predicated region
        $region53: #{tpu_custom_call.1} parent=21 // pred_check
          _
        $region54: #{tpu_custom_call.1} parent=21 // pred_check_branch
          %204 = sbr.rel target = $region56
        $region55: #{tpu_custom_call.1} parent=21 // pred_region
          %205 = sst [smem:[#allocation12]] [#allocation27]
          %206 = sst [smem:[#allocation13]] [#allocation26]
        $region56: #{tpu_custom_call.1} parent=21 // pred_fallthru
          _
        %208 = shalt.err (0)
        %s210 = sshll.u32 %s201, 4
        %s211 = int_to_ptr.hbm [resolvable:$true] %s210
        %s212 = sshll.u32 %s202, 4
        %s213 = int_to_ptr.vmem [resolvable:$true] %s212
        %215 = dma.hbm_to_vmem [thread:$0]  %s211, 16, %s213, [#allocation3]
        %s216 = sadd.s32 %s52, 2
        %s217 = sadd.s32 %s45, %s216
        %s218 = sld [smem:[#allocation5 + %s217]]
        %s219 = scalar_lea.hbm %s1, %s218
        %s220 = scalar_lea.vmem [#allocation2], %s216
        // Predicated region
        $region57: #{tpu_custom_call.1} parent=21 // pred_check
          _
        $region58: #{tpu_custom_call.1} parent=21 // pred_check_branch
          %222 = sbr.rel target = $region60
        $region59: #{tpu_custom_call.1} parent=21 // pred_region
          %223 = sst [smem:[#allocation12]] [#allocation29]
          %224 = sst [smem:[#allocation13]] [#allocation28]
        $region60: #{tpu_custom_call.1} parent=21 // pred_fallthru
          _
        %226 = shalt.err (0)
        %s228 = sshll.u32 %s219, 4
        %s229 = int_to_ptr.hbm [resolvable:$true] %s228
        %s230 = sshll.u32 %s220, 4
        %s231 = int_to_ptr.vmem [resolvable:$true] %s230
        %233 = dma.hbm_to_vmem [thread:$0]  %s229, 16, %s231, [#allocation3]
        %s234 = sshra.s32 %s217, 7
        %s235 = sand.u32 %s217, 127
        %s236 = sadd.s32 %s234, 1
        %s237 = smul.u32 %s236, 128
        %s238 = sshra.s32 %s217, 7
        %s239 = sand.u32 %s217, 127
        %s240 = sadd.s32 %s237, %s239
        %s241 = sld [smem:[#allocation5 + %s240]]
        %s242 = sadd.s32 %s52, 18
        %s243 = scalar_lea.hbm %s1, %s241
        %s244 = scalar_lea.vmem [#allocation2], %s242
        // Predicated region
        $region61: #{tpu_custom_call.1} parent=21 // pred_check
          _
        $region62: #{tpu_custom_call.1} parent=21 // pred_check_branch
          %246 = sbr.rel target = $region64
        $region63: #{tpu_custom_call.1} parent=21 // pred_region
          %247 = sst [smem:[#allocation12]] [#allocation31]
          %248 = sst [smem:[#allocation13]] [#allocation30]
        $region64: #{tpu_custom_call.1} parent=21 // pred_fallthru
          _
        %250 = shalt.err (0)
        %s252 = sshll.u32 %s243, 4
        %s253 = int_to_ptr.hbm [resolvable:$true] %s252
        %s254 = sshll.u32 %s244, 4
        %s255 = int_to_ptr.vmem [resolvable:$true] %s254
        %257 = dma.hbm_to_vmem [thread:$0]  %s253, 16, %s255, [#allocation3]
        %s258 = sadd.s32 %s234, 2
        %s259 = smul.u32 %s258, 128
        %s260 = sadd.s32 %s259, %s239
        %s261 = sld [smem:[#allocation5 + %s260]]
        %s262 = sadd.s32 %s52, 34
        %s263 = scalar_lea.hbm %s1, %s261
        %s264 = scalar_lea.vmem [#allocation2], %s262
        // Predicated region
        $region65: #{tpu_custom_call.1} parent=21 // pred_check
          _
        $region66: #{tpu_custom_call.1} parent=21 // pred_check_branch
          %266 = sbr.rel target = $region68
        $region67: #{tpu_custom_call.1} parent=21 // pred_region
          %267 = sst [smem:[#allocation12]] [#allocation33]
          %268 = sst [smem:[#allocation13]] [#allocation32]
        $region68: #{tpu_custom_call.1} parent=21 // pred_fallthru
          _
        %270 = shalt.err (0)
        %s272 = sshll.u32 %s263, 4
        %s273 = int_to_ptr.hbm [resolvable:$true] %s272
        %s274 = sshll.u32 %s264, 4
        %s275 = int_to_ptr.vmem [resolvable:$true] %s274
        %277 = dma.hbm_to_vmem [thread:$0]  %s273, 16, %s275, [#allocation3]
        %s278 = sadd.s32 %s234, 3
        %s279 = smul.u32 %s278, 128
        %s280 = sadd.s32 %s279, %s239
        %s281 = sld [smem:[#allocation5 + %s280]]
        %s282 = sadd.s32 %s52, 50
        %s283 = scalar_lea.hbm %s1, %s281
        %s284 = scalar_lea.vmem [#allocation2], %s282
        // Predicated region
        $region69: #{tpu_custom_call.1} parent=21 // pred_check
          _
        $region70: #{tpu_custom_call.1} parent=21 // pred_check_branch
          %286 = sbr.rel target = $region72
        $region71: #{tpu_custom_call.1} parent=21 // pred_region
          %287 = sst [smem:[#allocation12]] [#allocation35]
          %288 = sst [smem:[#allocation13]] [#allocation34]
        $region72: #{tpu_custom_call.1} parent=21 // pred_fallthru
          _
        %290 = shalt.err (0)
        %s292 = sshll.u32 %s283, 4
        %s293 = int_to_ptr.hbm [resolvable:$true] %s292
        %s294 = sshll.u32 %s284, 4
        %s295 = int_to_ptr.vmem [resolvable:$true] %s294
        %297 = dma.hbm_to_vmem [thread:$0]  %s293, 16, %s295, [#allocation3]
        %s298 = sadd.s32 %s52, 3
        %s299 = sadd.s32 %s45, %s298
        %s300 = sld [smem:[#allocation5 + %s299]]
        %s301 = scalar_lea.hbm %s1, %s300
        %s302 = scalar_lea.vmem [#allocation2], %s298
        // Predicated region
        $region73: #{tpu_custom_call.1} parent=21 // pred_check
          _
        $region74: #{tpu_custom_call.1} parent=21 // pred_check_branch
          %304 = sbr.rel target = $region76
        $region75: #{tpu_custom_call.1} parent=21 // pred_region
          %305 = sst [smem:[#allocation12]] [#allocation37]
          %306 = sst [smem:[#allocation13]] [#allocation36]
        $region76: #{tpu_custom_call.1} parent=21 // pred_fallthru
          _
        %308 = shalt.err (0)
        %s310 = sshll.u32 %s301, 4
        %s311 = int_to_ptr.hbm [resolvable:$true] %s310
        %s312 = sshll.u32 %s302, 4
        %s313 = int_to_ptr.vmem [resolvable:$true] %s312
        %315 = dma.hbm_to_vmem [thread:$0]  %s311, 16, %s313, [#allocation3]
        %s316 = sshra.s32 %s299, 7
        %s317 = sand.u32 %s299, 127
        %s318 = sadd.s32 %s316, 1
        %s319 = smul.u32 %s318, 128
        %s320 = sshra.s32 %s299, 7
        %s321 = sand.u32 %s299, 127
        %s322 = sadd.s32 %s319, %s321
        %s323 = sld [smem:[#allocation5 + %s322]]
        %s324 = sadd.s32 %s52, 19
        %s325 = scalar_lea.hbm %s1, %s323
        %s326 = scalar_lea.vmem [#allocation2], %s324
        // Predicated region
        $region77: #{tpu_custom_call.1} parent=21 // pred_check
          _
        $region78: #{tpu_custom_call.1} parent=21 // pred_check_branch
          %328 = sbr.rel target = $region80
        $region79: #{tpu_custom_call.1} parent=21 // pred_region
          %329 = sst [smem:[#allocation12]] [#allocation39]
          %330 = sst [smem:[#allocation13]] [#allocation38]
        $region80: #{tpu_custom_call.1} parent=21 // pred_fallthru
          _
        %332 = shalt.err (0)
        %s334 = sshll.u32 %s325, 4
        %s335 = int_to_ptr.hbm [resolvable:$true] %s334
        %s336 = sshll.u32 %s326, 4
        %s337 = int_to_ptr.vmem [resolvable:$true] %s336
        %339 = dma.hbm_to_vmem [thread:$0]  %s335, 16, %s337, [#allocation3]
        %s340 = sadd.s32 %s316, 2
        %s341 = smul.u32 %s340, 128
        %s342 = sadd.s32 %s341, %s321
        %s343 = sld [smem:[#allocation5 + %s342]]
        %s344 = sadd.s32 %s52, 35
        %s345 = scalar_lea.hbm %s1, %s343
        %s346 = scalar_lea.vmem [#allocation2], %s344
        // Predicated region
        $region81: #{tpu_custom_call.1} parent=21 // pred_check
          _
        $region82: #{tpu_custom_call.1} parent=21 // pred_check_branch
          %348 = sbr.rel target = $region84
        $region83: #{tpu_custom_call.1} parent=21 // pred_region
          %349 = sst [smem:[#allocation12]] [#allocation41]
          %350 = sst [smem:[#allocation13]] [#allocation40]
        $region84: #{tpu_custom_call.1} parent=21 // pred_fallthru
          _
        %352 = shalt.err (0)
        %s354 = sshll.u32 %s345, 4
        %s355 = int_to_ptr.hbm [resolvable:$true] %s354
        %s356 = sshll.u32 %s346, 4
        %s357 = int_to_ptr.vmem [resolvable:$true] %s356
        %359 = dma.hbm_to_vmem [thread:$0]  %s355, 16, %s357, [#allocation3]
        %s360 = sadd.s32 %s316, 3
        %s361 = smul.u32 %s360, 128
        %s362 = sadd.s32 %s361, %s321
        %s363 = sld [smem:[#allocation5 + %s362]]
        %s364 = sadd.s32 %s52, 51
        %s365 = scalar_lea.hbm %s1, %s363
        %s366 = scalar_lea.vmem [#allocation2], %s364
        // Predicated region
        $region85: #{tpu_custom_call.1} parent=21 // pred_check
          _
        $region86: #{tpu_custom_call.1} parent=21 // pred_check_branch
          %368 = sbr.rel target = $region88
        $region87: #{tpu_custom_call.1} parent=21 // pred_region
          %369 = sst [smem:[#allocation12]] [#allocation43]
          %370 = sst [smem:[#allocation13]] [#allocation42]
        $region88: #{tpu_custom_call.1} parent=21 // pred_fallthru
          _
        %372 = shalt.err (0)
        %s374 = sshll.u32 %s365, 4
        %s375 = int_to_ptr.hbm [resolvable:$true] %s374
        %s376 = sshll.u32 %s366, 4
        %s377 = int_to_ptr.vmem [resolvable:$true] %s376
        %379 = dma.hbm_to_vmem [thread:$0]  %s375, 16, %s377, [#allocation3]
        %s380 = sadd.s32 %s52, 4
        %s381 = sadd.s32 %s45, %s380
        %s382 = sld [smem:[#allocation5 + %s381]]
        %s383 = scalar_lea.hbm %s1, %s382
        %s384 = scalar_lea.vmem [#allocation2], %s380
        // Predicated region
        $region89: #{tpu_custom_call.1} parent=21 // pred_check
          _
        $region90: #{tpu_custom_call.1} parent=21 // pred_check_branch
          %386 = sbr.rel target = $region92
        $region91: #{tpu_custom_call.1} parent=21 // pred_region
          %387 = sst [smem:[#allocation12]] [#allocation45]
          %388 = sst [smem:[#allocation13]] [#allocation44]
        $region92: #{tpu_custom_call.1} parent=21 // pred_fallthru
          _
        %390 = shalt.err (0)
        %s392 = sshll.u32 %s383, 4
        %s393 = int_to_ptr.hbm [resolvable:$true] %s392
        %s394 = sshll.u32 %s384, 4
        %s395 = int_to_ptr.vmem [resolvable:$true] %s394
        %397 = dma.hbm_to_vmem [thread:$0]  %s393, 16, %s395, [#allocation3]
        %s398 = sshra.s32 %s381, 7
        %s399 = sand.u32 %s381, 127
        %s400 = sadd.s32 %s398, 1
        %s401 = smul.u32 %s400, 128
        %s402 = sshra.s32 %s381, 7
        %s403 = sand.u32 %s381, 127
        %s404 = sadd.s32 %s401, %s403
        %s405 = sld [smem:[#allocation5 + %s404]]
        %s406 = sadd.s32 %s52, 20
        %s407 = scalar_lea.hbm %s1, %s405
        %s408 = scalar_lea.vmem [#allocation2], %s406
        // Predicated region
        $region93: #{tpu_custom_call.1} parent=21 // pred_check
          _
        $region94: #{tpu_custom_call.1} parent=21 // pred_check_branch
          %410 = sbr.rel target = $region96
        $region95: #{tpu_custom_call.1} parent=21 // pred_region
          %411 = sst [smem:[#allocation12]] [#allocation47]
          %412 = sst [smem:[#allocation13]] [#allocation46]
        $region96: #{tpu_custom_call.1} parent=21 // pred_fallthru
          _
        %414 = shalt.err (0)
        %s416 = sshll.u32 %s407, 4
        %s417 = int_to_ptr.hbm [resolvable:$true] %s416
        %s418 = sshll.u32 %s408, 4
        %s419 = int_to_ptr.vmem [resolvable:$true] %s418
        %421 = dma.hbm_to_vmem [thread:$0]  %s417, 16, %s419, [#allocation3]
        %s422 = sadd.s32 %s398, 2
        %s423 = smul.u32 %s422, 128
        %s424 = sadd.s32 %s423, %s403
        %s425 = sld [smem:[#allocation5 + %s424]]
        %s426 = sadd.s32 %s52, 36
        %s427 = scalar_lea.hbm %s1, %s425
        %s428 = scalar_lea.vmem [#allocation2], %s426
        // Predicated region
        $region97: #{tpu_custom_call.1} parent=21 // pred_check
          _
        $region98: #{tpu_custom_call.1} parent=21 // pred_check_branch
          %430 = sbr.rel target = $region100
        $region99: #{tpu_custom_call.1} parent=21 // pred_region
          %431 = sst [smem:[#allocation12]] [#allocation49]
          %432 = sst [smem:[#allocation13]] [#allocation48]
        $region100: #{tpu_custom_call.1} parent=21 // pred_fallthru
          _
        %434 = shalt.err (0)
        %s436 = sshll.u32 %s427, 4
        %s437 = int_to_ptr.hbm [resolvable:$true] %s436
        %s438 = sshll.u32 %s428, 4
        %s439 = int_to_ptr.vmem [resolvable:$true] %s438
        %441 = dma.hbm_to_vmem [thread:$0]  %s437, 16, %s439, [#allocation3]
        %s442 = sadd.s32 %s398, 3
        %s443 = smul.u32 %s442, 128
        %s444 = sadd.s32 %s443, %s403
        %s445 = sld [smem:[#allocation5 + %s444]]
        %s446 = sadd.s32 %s52, 52
        %s447 = scalar_lea.hbm %s1, %s445
        %s448 = scalar_lea.vmem [#allocation2], %s446
        // Predicated region
        $region101: #{tpu_custom_call.1} parent=21 // pred_check
          _
        $region102: #{tpu_custom_call.1} parent=21 // pred_check_branch
          %450 = sbr.rel target = $region104
        $region103: #{tpu_custom_call.1} parent=21 // pred_region
          %451 = sst [smem:[#allocation12]] [#allocation51]
          %452 = sst [smem:[#allocation13]] [#allocation50]
        $region104: #{tpu_custom_call.1} parent=21 // pred_fallthru
          _
        %454 = shalt.err (0)
        %s456 = sshll.u32 %s447, 4
        %s457 = int_to_ptr.hbm [resolvable:$true] %s456
        %s458 = sshll.u32 %s448, 4
        %s459 = int_to_ptr.vmem [resolvable:$true] %s458
        %461 = dma.hbm_to_vmem [thread:$0]  %s457, 16, %s459, [#allocation3]
        %s462 = sadd.s32 %s52, 5
        %s463 = sadd.s32 %s45, %s462
        %s464 = sld [smem:[#allocation5 + %s463]]
        %s465 = scalar_lea.hbm %s1, %s464
        %s466 = scalar_lea.vmem [#allocation2], %s462
        // Predicated region
        $region105: #{tpu_custom_call.1} parent=21 // pred_check
          _
        $region106: #{tpu_custom_call.1} parent=21 // pred_check_branch
          %468 = sbr.rel target = $region108
        $region107: #{tpu_custom_call.1} parent=21 // pred_region
          %469 = sst [smem:[#allocation12]] [#allocation53]
          %470 = sst [smem:[#allocation13]] [#allocation52]
        $region108: #{tpu_custom_call.1} parent=21 // pred_fallthru
          _
        %472 = shalt.err (0)
        %s474 = sshll.u32 %s465, 4
        %s475 = int_to_ptr.hbm [resolvable:$true] %s474
        %s476 = sshll.u32 %s466, 4
        %s477 = int_to_ptr.vmem [resolvable:$true] %s476
        %479 = dma.hbm_to_vmem [thread:$0]  %s475, 16, %s477, [#allocation3]
        %s480 = sshra.s32 %s463, 7
        %s481 = sand.u32 %s463, 127
        %s482 = sadd.s32 %s480, 1
        %s483 = smul.u32 %s482, 128
        %s484 = sshra.s32 %s463, 7
        %s485 = sand.u32 %s463, 127
        %s486 = sadd.s32 %s483, %s485
        %s487 = sld [smem:[#allocation5 + %s486]]
        %s488 = sadd.s32 %s52, 21
        %s489 = scalar_lea.hbm %s1, %s487
        %s490 = scalar_lea.vmem [#allocation2], %s488
        // Predicated region
        $region109: #{tpu_custom_call.1} parent=21 // pred_check
          _
        $region110: #{tpu_custom_call.1} parent=21 // pred_check_branch
          %492 = sbr.rel target = $region112
        $region111: #{tpu_custom_call.1} parent=21 // pred_region
          %493 = sst [smem:[#allocation12]] [#allocation55]
          %494 = sst [smem:[#allocation13]] [#allocation54]
        $region112: #{tpu_custom_call.1} parent=21 // pred_fallthru
          _
        %496 = shalt.err (0)
        %s498 = sshll.u32 %s489, 4
        %s499 = int_to_ptr.hbm [resolvable:$true] %s498
        %s500 = sshll.u32 %s490, 4
        %s501 = int_to_ptr.vmem [resolvable:$true] %s500
        %503 = dma.hbm_to_vmem [thread:$0]  %s499, 16, %s501, [#allocation3]
        %s504 = sadd.s32 %s480, 2
        %s505 = smul.u32 %s504, 128
        %s506 = sadd.s32 %s505, %s485
        %s507 = sld [smem:[#allocation5 + %s506]]
        %s508 = sadd.s32 %s52, 37
        %s509 = scalar_lea.hbm %s1, %s507
        %s510 = scalar_lea.vmem [#allocation2], %s508
        // Predicated region
        $region113: #{tpu_custom_call.1} parent=21 // pred_check
          _
        $region114: #{tpu_custom_call.1} parent=21 // pred_check_branch
          %512 = sbr.rel target = $region116
        $region115: #{tpu_custom_call.1} parent=21 // pred_region
          %513 = sst [smem:[#allocation12]] [#allocation57]
          %514 = sst [smem:[#allocation13]] [#allocation56]
        $region116: #{tpu_custom_call.1} parent=21 // pred_fallthru
          _
        %516 = shalt.err (0)
        %s518 = sshll.u32 %s509, 4
        %s519 = int_to_ptr.hbm [resolvable:$true] %s518
        %s520 = sshll.u32 %s510, 4
        %s521 = int_to_ptr.vmem [resolvable:$true] %s520
        %523 = dma.hbm_to_vmem [thread:$0]  %s519, 16, %s521, [#allocation3]
        %s524 = sadd.s32 %s480, 3
        %s525 = smul.u32 %s524, 128
        %s526 = sadd.s32 %s525, %s485
        %s527 = sld [smem:[#allocation5 + %s526]]
        %s528 = sadd.s32 %s52, 53
        %s529 = scalar_lea.hbm %s1, %s527
        %s530 = scalar_lea.vmem [#allocation2], %s528
        // Predicated region
        $region117: #{tpu_custom_call.1} parent=21 // pred_check
          _
        $region118: #{tpu_custom_call.1} parent=21 // pred_check_branch
          %532 = sbr.rel target = $region120
        $region119: #{tpu_custom_call.1} parent=21 // pred_region
          %533 = sst [smem:[#allocation12]] [#allocation59]
          %534 = sst [smem:[#allocation13]] [#allocation58]
        $region120: #{tpu_custom_call.1} parent=21 // pred_fallthru
          _
        %536 = shalt.err (0)
        %s538 = sshll.u32 %s529, 4
        %s539 = int_to_ptr.hbm [resolvable:$true] %s538
        %s540 = sshll.u32 %s530, 4
        %s541 = int_to_ptr.vmem [resolvable:$true] %s540
        %543 = dma.hbm_to_vmem [thread:$0]  %s539, 16, %s541, [#allocation3]
        %s544 = sadd.s32 %s52, 6
        %s545 = sadd.s32 %s45, %s544
        %s546 = sld [smem:[#allocation5 + %s545]]
        %s547 = scalar_lea.hbm %s1, %s546
        %s548 = scalar_lea.vmem [#allocation2], %s544
        // Predicated region
        $region121: #{tpu_custom_call.1} parent=21 // pred_check
          _
        $region122: #{tpu_custom_call.1} parent=21 // pred_check_branch
          %550 = sbr.rel target = $region124
        $region123: #{tpu_custom_call.1} parent=21 // pred_region
          %551 = sst [smem:[#allocation12]] [#allocation61]
          %552 = sst [smem:[#allocation13]] [#allocation60]
        $region124: #{tpu_custom_call.1} parent=21 // pred_fallthru
          _
        %554 = shalt.err (0)
        %s556 = sshll.u32 %s547, 4
        %s557 = int_to_ptr.hbm [resolvable:$true] %s556
        %s558 = sshll.u32 %s548, 4
        %s559 = int_to_ptr.vmem [resolvable:$true] %s558
        %561 = dma.hbm_to_vmem [thread:$0]  %s557, 16, %s559, [#allocation3]
        %s562 = sshra.s32 %s545, 7
        %s563 = sand.u32 %s545, 127
        %s564 = sadd.s32 %s562, 1
        %s565 = smul.u32 %s564, 128
        %s566 = sshra.s32 %s545, 7
        %s567 = sand.u32 %s545, 127
        %s568 = sadd.s32 %s565, %s567
        %s569 = sld [smem:[#allocation5 + %s568]]
        %s570 = sadd.s32 %s52, 22
        %s571 = scalar_lea.hbm %s1, %s569
        %s572 = scalar_lea.vmem [#allocation2], %s570
        // Predicated region
        $region125: #{tpu_custom_call.1} parent=21 // pred_check
          _
        $region126: #{tpu_custom_call.1} parent=21 // pred_check_branch
          %574 = sbr.rel target = $region128
        $region127: #{tpu_custom_call.1} parent=21 // pred_region
          %575 = sst [smem:[#allocation12]] [#allocation63]
          %576 = sst [smem:[#allocation13]] [#allocation62]
        $region128: #{tpu_custom_call.1} parent=21 // pred_fallthru
          _
        %578 = shalt.err (0)
        %s580 = sshll.u32 %s571, 4
        %s581 = int_to_ptr.hbm [resolvable:$true] %s580
        %s582 = sshll.u32 %s572, 4
        %s583 = int_to_ptr.vmem [resolvable:$true] %s582
        %585 = dma.hbm_to_vmem [thread:$0]  %s581, 16, %s583, [#allocation3]
        %s586 = sadd.s32 %s562, 2
        %s587 = smul.u32 %s586, 128
        %s588 = sadd.s32 %s587, %s567
        %s589 = sld [smem:[#allocation5 + %s588]]
        %s590 = sadd.s32 %s52, 38
        %s591 = scalar_lea.hbm %s1, %s589
        %s592 = scalar_lea.vmem [#allocation2], %s590
        // Predicated region
        $region129: #{tpu_custom_call.1} parent=21 // pred_check
          _
        $region130: #{tpu_custom_call.1} parent=21 // pred_check_branch
          %594 = sbr.rel target = $region132
        $region131: #{tpu_custom_call.1} parent=21 // pred_region
          %595 = sst [smem:[#allocation12]] [#allocation65]
          %596 = sst [smem:[#allocation13]] [#allocation64]
        $region132: #{tpu_custom_call.1} parent=21 // pred_fallthru
          _
        %598 = shalt.err (0)
        %s600 = sshll.u32 %s591, 4
        %s601 = int_to_ptr.hbm [resolvable:$true] %s600
        %s602 = sshll.u32 %s592, 4
        %s603 = int_to_ptr.vmem [resolvable:$true] %s602
        %605 = dma.hbm_to_vmem [thread:$0]  %s601, 16, %s603, [#allocation3]
        %s606 = sadd.s32 %s562, 3
        %s607 = smul.u32 %s606, 128
        %s608 = sadd.s32 %s607, %s567
        %s609 = sld [smem:[#allocation5 + %s608]]
        %s610 = sadd.s32 %s52, 54
        %s611 = scalar_lea.hbm %s1, %s609
        %s612 = scalar_lea.vmem [#allocation2], %s610
        // Predicated region
        $region133: #{tpu_custom_call.1} parent=21 // pred_check
          _
        $region134: #{tpu_custom_call.1} parent=21 // pred_check_branch
          %614 = sbr.rel target = $region136
        $region135: #{tpu_custom_call.1} parent=21 // pred_region
          %615 = sst [smem:[#allocation12]] [#allocation67]
          %616 = sst [smem:[#allocation13]] [#allocation66]
        $region136: #{tpu_custom_call.1} parent=21 // pred_fallthru
          _
        %618 = shalt.err (0)
        %s620 = sshll.u32 %s611, 4
        %s621 = int_to_ptr.hbm [resolvable:$true] %s620
        %s622 = sshll.u32 %s612, 4
        %s623 = int_to_ptr.vmem [resolvable:$true] %s622
        %625 = dma.hbm_to_vmem [thread:$0]  %s621, 16, %s623, [#allocation3]
        %s626 = sadd.s32 %s52, 7
        %s627 = sadd.s32 %s45, %s626
        %s628 = sld [smem:[#allocation5 + %s627]]
        %s629 = scalar_lea.hbm %s1, %s628
        %s630 = scalar_lea.vmem [#allocation2], %s626
        // Predicated region
        $region137: #{tpu_custom_call.1} parent=21 // pred_check
          _
        $region138: #{tpu_custom_call.1} parent=21 // pred_check_branch
          %632 = sbr.rel target = $region140
        $region139: #{tpu_custom_call.1} parent=21 // pred_region
          %633 = sst [smem:[#allocation12]] [#allocation69]
          %634 = sst [smem:[#allocation13]] [#allocation68]
        $region140: #{tpu_custom_call.1} parent=21 // pred_fallthru
          _
        %636 = shalt.err (0)
        %s638 = sshll.u32 %s629, 4
        %s639 = int_to_ptr.hbm [resolvable:$true] %s638
        %s640 = sshll.u32 %s630, 4
        %s641 = int_to_ptr.vmem [resolvable:$true] %s640
        %643 = dma.hbm_to_vmem [thread:$0]  %s639, 16, %s641, [#allocation3]
        %s644 = sshra.s32 %s627, 7
        %s645 = sand.u32 %s627, 127
        %s646 = sadd.s32 %s644, 1
        %s647 = smul.u32 %s646, 128
        %s648 = sshra.s32 %s627, 7
        %s649 = sand.u32 %s627, 127
        %s650 = sadd.s32 %s647, %s649
        %s651 = sld [smem:[#allocation5 + %s650]]
        %s652 = sadd.s32 %s52, 23
        %s653 = scalar_lea.hbm %s1, %s651
        %s654 = scalar_lea.vmem [#allocation2], %s652
        // Predicated region
        $region141: #{tpu_custom_call.1} parent=21 // pred_check
          _
        $region142: #{tpu_custom_call.1} parent=21 // pred_check_branch
          %656 = sbr.rel target = $region144
        $region143: #{tpu_custom_call.1} parent=21 // pred_region
          %657 = sst [smem:[#allocation12]] [#allocation71]
          %658 = sst [smem:[#allocation13]] [#allocation70]
        $region144: #{tpu_custom_call.1} parent=21 // pred_fallthru
          _
        %660 = shalt.err (0)
        %s662 = sshll.u32 %s653, 4
        %s663 = int_to_ptr.hbm [resolvable:$true] %s662
        %s664 = sshll.u32 %s654, 4
        %s665 = int_to_ptr.vmem [resolvable:$true] %s664
        %667 = dma.hbm_to_vmem [thread:$0]  %s663, 16, %s665, [#allocation3]
        %s668 = sadd.s32 %s644, 2
        %s669 = smul.u32 %s668, 128
        %s670 = sadd.s32 %s669, %s649
        %s671 = sld [smem:[#allocation5 + %s670]]
        %s672 = sadd.s32 %s52, 39
        %s673 = scalar_lea.hbm %s1, %s671
        %s674 = scalar_lea.vmem [#allocation2], %s672
        // Predicated region
        $region145: #{tpu_custom_call.1} parent=21 // pred_check
          _
        $region146: #{tpu_custom_call.1} parent=21 // pred_check_branch
          %676 = sbr.rel target = $region148
        $region147: #{tpu_custom_call.1} parent=21 // pred_region
          %677 = sst [smem:[#allocation12]] [#allocation73]
          %678 = sst [smem:[#allocation13]] [#allocation72]
        $region148: #{tpu_custom_call.1} parent=21 // pred_fallthru
          _
        %680 = shalt.err (0)
        %s682 = sshll.u32 %s673, 4
        %s683 = int_to_ptr.hbm [resolvable:$true] %s682
        %s684 = sshll.u32 %s674, 4
        %s685 = int_to_ptr.vmem [resolvable:$true] %s684
        %687 = dma.hbm_to_vmem [thread:$0]  %s683, 16, %s685, [#allocation3]
        %s688 = sadd.s32 %s644, 3
        %s689 = smul.u32 %s688, 128
        %s690 = sadd.s32 %s689, %s649
        %s691 = sld [smem:[#allocation5 + %s690]]
        %s692 = sadd.s32 %s52, 55
        %s693 = scalar_lea.hbm %s1, %s691
        %s694 = scalar_lea.vmem [#allocation2], %s692
        // Predicated region
        $region149: #{tpu_custom_call.1} parent=21 // pred_check
          _
        $region150: #{tpu_custom_call.1} parent=21 // pred_check_branch
          %696 = sbr.rel target = $region152
        $region151: #{tpu_custom_call.1} parent=21 // pred_region
          %697 = sst [smem:[#allocation12]] [#allocation75]
          %698 = sst [smem:[#allocation13]] [#allocation74]
        $region152: #{tpu_custom_call.1} parent=21 // pred_fallthru
          _
        %700 = shalt.err (0)
        %s702 = sshll.u32 %s693, 4
        %s703 = int_to_ptr.hbm [resolvable:$true] %s702
        %s704 = sshll.u32 %s694, 4
        %s705 = int_to_ptr.vmem [resolvable:$true] %s704
        %707 = dma.hbm_to_vmem [thread:$0]  %s703, 16, %s705, [#allocation3]
      $region22: #{tpu_custom_call.1} parent=16 // loop_footer
        %s51 = sadd.s32 1, %s47
      $region23: #{tpu_custom_call.1} parent=16 // loop_footer_branch
        %46 = sbr.rel target = $region19
      $region24: #{tpu_custom_call.1} parent=16 // loop_exit
        _
    $region17: #{tpu_custom_call.1} parent=1 // pred_fallthru
      _
    %s708 = ssub.s32 0, 0
    %s709 = ssub.s32 0, 0
    %p710 = scmp.ne.s32.totalorder 0, 0
    %p711 = scmp.lt.s32.totalorder 0, 0
    %p712 = pnand %p711, %p710
    %p713 = pneg %p712
    %s714 = sadd.s32 0, 2
    %s715 = scalar_select %p713, %s714, 0
    loop: start=0, step=1, limit=8
    $region153: #{tpu_custom_call.1} parent=1 // loop_pre_header
      _
    $region154: #{tpu_custom_call.1} parent=1 // loop_header
      %s717 = sphi 0, %s721
      %p718 = scmp.ge.s32.totalorder %s717, 8
    $region155: #{tpu_custom_call.1} parent=1 // loop_header_branch
      %720 = sbr.rel (%p718) target = $region159
    $region156: #{tpu_custom_call.1} parent=1 // loop_body
      %s722 = scalar_lea.sflag [#allocation3], %s715
      %s723 = smul.u32 1, 1
      %s724 = sshll.u32 %s723, 4
      %725 = dma.done %s722, %s724
      %s726 = sshll.u32 %s723, 4
      %727 = dma.done %s722, %s726
      %s728 = sshll.u32 %s723, 4
      %729 = dma.done %s722, %s728
      %s730 = sshll.u32 %s723, 4
      %731 = dma.done %s722, %s730
      %s732 = sshll.u32 %s723, 4
      %733 = dma.done %s722, %s732
      %s734 = sshll.u32 %s723, 4
      %735 = dma.done %s722, %s734
      %s736 = sshll.u32 %s723, 4
      %737 = dma.done %s722, %s736
      %s738 = sshll.u32 %s723, 4
      %739 = dma.done %s722, %s738
    $region157: #{tpu_custom_call.1} parent=1 // loop_footer
      %s721 = sadd.s32 1, %s717
    $region158: #{tpu_custom_call.1} parent=1 // loop_footer_branch
      %716 = sbr.rel target = $region154
    $region159: #{tpu_custom_call.1} parent=1 // loop_exit
      _
    %s740 = smul.u32 %s715, 64
    %s741 = scalar_lea.vmem [#allocation2], %s740
    %v742 = vld [vmem:[%s741] sm:$0xff]
    %v743 = vld [vmem:[%s741 + $0x8] sm:$0xff]
    %s744 = sadd.s32 %s740, 16
    %s745 = scalar_lea.vmem [#allocation2], %s744
    %v746 = vld [vmem:[%s745] sm:$0xff]
    %v747 = vld [vmem:[%s745 + $0x8] sm:$0xff]
    %s748 = sadd.s32 %s740, 32
    %s749 = scalar_lea.vmem [#allocation2], %s748
    %v750 = vld [vmem:[%s749] sm:$0xff]
    %v751 = vld [vmem:[%s749 + $0x8] sm:$0xff]
    %s752 = sadd.s32 %s740, 48
    %s753 = scalar_lea.vmem [#allocation2], %s752
    %v754 = vld [vmem:[%s753] sm:$0xff]
    %v755 = vld [vmem:[%s753 + $0x8] sm:$0xff]
    %v756 = vadd.f32 %v742, %v746
    %v757 = vadd.f32 %v743, %v747
    %v758 = vadd.f32 %v750, %v754
    %v759 = vadd.f32 %v751, %v755
    %v760 = vld [vmem:[#allocation6] sm:$0xff]
    %v761 = vld [vmem:[#allocation6 + $0x8] sm:$0xff]
    %v762 = vld [vmem:[#allocation6 + $0x10] sm:$0xff]
    %v763 = vld [vmem:[#allocation6 + $0x18] sm:$0xff]
    %s764 = scalar_lea.vmem [#allocation6], 32
    %v765 = vld [vmem:[%s764] sm:$0xff]
    %v766 = vld [vmem:[%s764 + $0x8] sm:$0xff]
    %v767 = vld [vmem:[%s764 + $0x10] sm:$0xff]
    %v768 = vld [vmem:[%s764 + $0x18] sm:$0xff]
    %vm769 = vcmask 261120
    %v771 = vsel %vm769, %v758, 0
    %v774 = vsel %vm769, %v759, 0
    %776 = vmatpush.msra.mxu0 0.0
    %777 = vmatpush.msra.mxu0 0.0
    %778 = vmatpush.msra.mxu0 0.0
    %779 = vmatpush.msra.mxu0 0.0
    %780 = vmatpush.msra.mxu0 0.0
    %781 = vmatpush.msra.mxu0 0.0
    %782 = vmatpush.msra.mxu0 0.0
    %783 = vmatpush.msra.mxu0 0.0
    %784 = vmatpush.msra.mxu0 0.0
    %785 = vmatpush.msra.mxu0 0.0
    %786 = vmatpush.msra.mxu0 0.0
    %787 = vmatpush.msra.mxu0 0.0
    %788 = vmatpush.msra.mxu0 %v768
    %789 = vmatpush.msra.mxu0 %v767
    %790 = vmatpush.msra.mxu0 %v766
    %791 = vmatpush.msra.mxu0 %v765
    %792 = vmatmul.f32.gmra.mxu0 %v771
    %v793 = vpop.f32.mrf.mxu0
    %v794 = vadd.f32 0.0, %v793
    %795 = vmatmul.f32.gmra.mxu0 %v774
    %v796 = vpop.f32.mrf.mxu0
    %v797 = vadd.f32 0.0, %v796
    %798 = vdwg.mxu0
    %v800 = vsel %vm769, %v756, 0
    %v803 = vsel %vm769, %v757, 0
    %805 = vmatpush.msra.mxu0 0.0
    %806 = vmatpush.msra.mxu0 0.0
    %807 = vmatpush.msra.mxu0 0.0
    %808 = vmatpush.msra.mxu0 0.0
    %809 = vmatpush.msra.mxu0 0.0
    %810 = vmatpush.msra.mxu0 0.0
    %811 = vmatpush.msra.mxu0 0.0
    %812 = vmatpush.msra.mxu0 0.0
    %813 = vmatpush.msra.mxu0 0.0
    %814 = vmatpush.msra.mxu0 0.0
    %815 = vmatpush.msra.mxu0 0.0
    %816 = vmatpush.msra.mxu0 0.0
    %817 = vmatpush.msra.mxu0 %v763
    %818 = vmatpush.msra.mxu0 %v762
    %819 = vmatpush.msra.mxu0 %v761
    %820 = vmatpush.msra.mxu0 %v760
    %821 = vmatmul.f32.gmra.mxu0 %v800
    %v822 = vpop.f32.mrf.mxu0
    %v823 = vadd.f32 %v794, %v822
    %824 = vmatmul.f32.gmra.mxu0 %v803
    %v825 = vpop.f32.mrf.mxu0
    %v826 = vadd.f32 %v797, %v825
    %827 = vdwg.mxu0
    %v828 = vmul.f32 %v756, %v758
    %v829 = vmul.f32 %v757, %v759
    %s830 = scalar_lea.vmem [#allocation6], 64
    %v831 = vld [vmem:[%s830] sm:$0xff]
    %v832 = vld [vmem:[%s830 + $0x8] sm:$0xff]
    %v833 = vld [vmem:[%s830 + $0x10] sm:$0xff]
    %v834 = vld [vmem:[%s830 + $0x18] sm:$0xff]
    %v836 = vsel %vm769, %v828, 0
    %v839 = vsel %vm769, %v829, 0
    %841 = vmatpush.msra.mxu0 0.0
    %842 = vmatpush.msra.mxu0 0.0
    %843 = vmatpush.msra.mxu0 0.0
    %844 = vmatpush.msra.mxu0 0.0
    %845 = vmatpush.msra.mxu0 0.0
    %846 = vmatpush.msra.mxu0 0.0
    %847 = vmatpush.msra.mxu0 0.0
    %848 = vmatpush.msra.mxu0 0.0
    %849 = vmatpush.msra.mxu0 0.0
    %850 = vmatpush.msra.mxu0 0.0
    %851 = vmatpush.msra.mxu0 0.0
    %852 = vmatpush.msra.mxu0 0.0
    %853 = vmatpush.msra.mxu0 %v834
    %854 = vmatpush.msra.mxu0 %v833
    %855 = vmatpush.msra.mxu0 %v832
    %856 = vmatpush.msra.mxu0 %v831
    %857 = vmatmul.f32.gmra.mxu0 %v836
    %v858 = vpop.f32.mrf.mxu0
    %v859 = vadd.f32 0.0, %v858
    %860 = vmatmul.f32.gmra.mxu0 %v839
    %v861 = vpop.f32.mrf.mxu0
    %v862 = vadd.f32 0.0, %v861
    %863 = vdwg.mxu0
    %v864 = vadd.f32 %v823, %v859
    %v865 = vadd.f32 %v826, %v862
    %v866 = vld [vmem:[%s3] sm:$0x1]
    %v868 = vperm.slane %v866, 0
    %v870 = vadd.f32 %v864, %v868
    %v871 = vadd.f32 %v865, %v868
    %872 = vst [vmem:[#allocation9] sm:$0xff] %v870
    %873 = vst [vmem:[#allocation9 + $0x8] sm:$0xff] %v871
    // Predicated region
    $region160: #{tpu_custom_call.1} parent=1 // pred_check
      _
    $region161: #{tpu_custom_call.1} parent=1 // pred_check_branch
      %875 = sbr.rel (0) target = $region163
    $region162: #{tpu_custom_call.1} parent=1 // pred_region
      %s876 = sadd.s32 0, 0
      %s877 = smul.u32 2, %s876
      %879 = vsyncadd [#allocation8], 0
      %s880 = smul.addr %s877, 8
      %s881 = scalar_lea.hbm %s4, %s880
      %s882 = sshll.u32 [#allocation9], 4
      %s883 = int_to_ptr.vmem [resolvable:$true] %s882
      %s884 = sshll.u32 %s881, 4
      %s885 = int_to_ptr.hbm [resolvable:$true] %s884
      %890 = dma.vmem_to_hbm [thread:$0]  %s883, 256, %s885, [#allocation8], 128, 128, 8
    $region163: #{tpu_custom_call.1} parent=1 // pred_fallthru
      _
    // Predicated region
    $region164: #{tpu_custom_call.1} parent=1 // pred_check
      _
    $region165: #{tpu_custom_call.1} parent=1 // pred_check_branch
      %892 = sbr.rel (0) target = $region167
    $region166: #{tpu_custom_call.1} parent=1 // pred_region
      %894 = dma.done [#allocation8], 256
    $region167: #{tpu_custom_call.1} parent=1 // pred_fallthru
      _
    %895 = vsyncpa [#allocation7], 1
    %896 = vsyncpa [#allocation8], 1
  %897 = vsyncmov [#allocation3]
  %s898 = vpop.sfrf %897
  %p899 = scmp.eq.s32.totalorder %s898, 0
  %p900 = pneg %p899
  %902 = shalt.err (%p900)
  %s903 = scalar_lea.sflag [#allocation3], 1
  %904 = vsyncmov %s903
  %s905 = vpop.sfrf %904
  %p906 = scmp.eq.s32.totalorder %s905, 0
  %p907 = pneg %p906
  %909 = shalt.err (%p907)

</llo_original>
